<compile_context>
chip_gen: v5e
topology: v5e:2x2
jax: 0.10.0
libtpu: 0.0.40
codegen_flags: <defaults>
</compile_context>

<pallas_src>
import functools

import jax
import jax.numpy as jnp
from jax import lax
from jax.experimental import pallas as pl
from jax.experimental.pallas import tpu as pltpu


_INV_SQRT2 = 0.7071067811865476  # hoisted constant for exact erf-GELU


def _layernorm(x, gamma, beta, eps=1e-5):
    mu = jnp.mean(x, axis=-1, keepdims=True)
    var = jnp.mean((x - mu) ** 2, axis=-1, keepdims=True)
    return (x - mu) * lax.rsqrt(var + eps) * gamma + beta


def _gelu_exact(x):
    # nn.GELU default = exact erf-based GELU (kept in f32 on the VPU).
    return 0.5 * x * (1.0 + lax.erf(x * _INV_SQRT2))


def encoder_layer_kernel(
    x_ref,                    # (1, L, D)
    g1_ref, b1_ref,           # (1, D) each      -- norm1
    wqkv_ref,                 # (D, 3D)          -- qkv weight, q-cols pre-scaled by hd^-0.5
    wp_ref, bp_ref,           # (D, D), (1, D)   -- attn proj
    g2_ref, b2_ref,           # (1, D) each      -- norm2
    w1_ref, bb1_ref,          # (D, Hf), (1, Hf) -- ffn.fc1
    w2_ref, bb2_ref,          # (Hf, D), (1, D)  -- ffn.fc2
    o_ref,                    # (1, L, D)
    ctx_sc,                   # VMEM scratch (L, D) in compute dtype -- merged heads
    *, num_heads, exact_softmax_div,
):
    _, L, D = x_ref.shape
    hd = D // num_heads
    cdt = wqkv_ref.dtype      # matmul compute dtype (bf16 or f32)

    x = x_ref[0].astype(jnp.float32)                           # (L, D)

    # ---------------- attention branch ----------------
    xn = _layernorm(x, g1_ref[...].astype(jnp.float32),
                    b1_ref[...].astype(jnp.float32))
    # Attention scale is already folded into wqkv's q-columns (host side).
    qkv = jnp.dot(xn.astype(cdt), wqkv_ref[...],
                  preferred_element_type=jnp.float32)          # (L, 3D) f32

    # Split heads: one stacked (3H, L, hd) tensor, leading-axis slices for
    # q/k/v, then batched einsums (single MXU stream, no per-head tiny dots).
    # PyTorch column layout is (qkv_idx, head, d) so slice i covers
    # columns [i*hd, (i+1)*hd) with i = qkv_idx*H + h.
    qkvh = jnp.stack(
        [qkv[:, i * hd:(i + 1) * hd] for i in range(3 * num_heads)],
        axis=0).astype(cdt)                                    # (3H, L, hd)
    q = qkvh[:num_heads]                                       # (H, L, hd)
    k = qkvh[num_heads:2 * num_heads]
    v = qkvh[2 * num_heads:]

    s = jnp.einsum("hld,hmd->hlm", q, k,
                   preferred_element_type=jnp.float32)         # (H, L, L)
    s = s - jnp.max(s, axis=-1, keepdims=True)
    p = jnp.exp(s)
    denom = jnp.sum(p, axis=-1, keepdims=True)                 # (H, L, 1)
    # Flash-style: normalize AFTER the PV matmul (H*L*hd work, not H*L*L).
    ctx = jnp.einsum("hlm,hmd->hld", p.astype(cdt), v,
                     preferred_element_type=jnp.float32)       # (H, L, hd)
    if exact_softmax_div:
        ctx = ctx / denom                                      # exact f32 path
    else:
        ctx = ctx * pl.reciprocal(denom, approx=True)          # EUP slot, ~free

    # Merge heads via slice stores into a compute-dtype scratch (no f32
    # round-trip / extra cast pass before the proj matmul).
    # NOTE: hd-wide column stores are masked unless hd % 128 == 0.
    for h in range(num_heads):
        ctx_sc[:, h * hd:(h + 1) * hd] = ctx[h].astype(cdt)

    attn_out = (jnp.dot(ctx_sc[...], wp_ref[...],
                        preferred_element_type=jnp.float32)
                + bp_ref[...].astype(jnp.float32))
    x = x + attn_out                                            # residual 1

    # ---------------- FFN branch ----------------
    xn2 = _layernorm(x, g2_ref[...].astype(jnp.float32),
                     b2_ref[...].astype(jnp.float32))
    h1 = (jnp.dot(xn2.astype(cdt), w1_ref[...],
                  preferred_element_type=jnp.float32)
          + bb1_ref[...].astype(jnp.float32))                   # (L, Hf)
    h1 = _gelu_exact(h1)                                        # f32 on VPU
    h2 = (jnp.dot(h1.astype(cdt), w2_ref[...],
                  preferred_element_type=jnp.float32)
          + bb2_ref[...].astype(jnp.float32))                   # (L, D)
    x = x + h2                                                  # residual 2

    o_ref[0] = x.astype(o_ref.dtype)


def _vmem_limit_bytes():
    """Per-generation scoped VMEM budget: ~85% of physical, 8 MiB headroom."""
    try:
        cap = int(pltpu.get_tpu_info().vmem_capacity_bytes)
        return max(32 * 1024 * 1024,
                   min(int(cap * 0.85), cap - 8 * 1024 * 1024))
    except Exception:
        return 64 * 1024 * 1024   # conservative fallback


def _make_call(N, L, D, Hf, out_dtype, num_heads, exact_softmax_div,
               weight_dtype, single_buffer_weights):
    kernel = functools.partial(encoder_layer_kernel,
                               num_heads=num_heads,
                               exact_softmax_div=exact_softmax_div)

    def wspec(shape):
        zero = (0,) * len(shape)
        if single_buffer_weights:
            # Grid-invariant operand: DMA'd once; single-buffer to halve its
            # VMEM residency (default pipelining reserves 2x).
            return pl.BlockSpec(shape, lambda i, z=zero: z,
                                pipeline_mode=pl.Buffered(1))
        return pl.BlockSpec(shape, lambda i, z=zero: z)

    in_specs = [
        pl.BlockSpec((1, L, D), lambda i: (i, 0, 0)),   # x (per-batch, pipelined)
        wspec((1, D)), wspec((1, D)),                   # norm1 gamma/beta
        wspec((D, 3 * D)),                              # qkv weight
        wspec((D, D)), wspec((1, D)),                   # proj W, b
        wspec((1, D)), wspec((1, D)),                   # norm2 gamma/beta
        wspec((D, Hf)), wspec((1, Hf)),                 # fc1 W, b
        wspec((Hf, D)), wspec((1, D)),                  # fc2 W, b
    ]

    return pl.pallas_call(
        kernel,
        out_shape=jax.ShapeDtypeStruct((N, L, D), out_dtype),
        grid_spec=pltpu.PrefetchScalarGridSpec(
            num_scalar_prefetch=0,
            grid=(N,),
            in_specs=in_specs,
            out_specs=pl.BlockSpec((1, L, D), lambda i: (i, 0, 0)),
            scratch_shapes=[pltpu.VMEM((L, D), weight_dtype)],
        ),
        compiler_params=pltpu.CompilerParams(
            dimension_semantics=("parallel",),      # batch axis -> both TCs on v7x
            vmem_limit_bytes=_vmem_limit_bytes(),
        ),
    )


def encoder_layer(x, params, *, num_heads, weight_dtype=jnp.bfloat16):
    N, L, D = x.shape
    assert D % num_heads == 0, "dim must be divisible by num_heads"
    Hf = params["w1"].shape[1]
    hd = D // num_heads
    scale = hd ** (-0.5)

    # Fold the attention scale into the q-columns of the qkv weight (host-side,
    # one-time, zero in-kernel cost; qkv_bias=False so there is no bias term).
    col_scale = jnp.concatenate(
        [jnp.full((D,), scale, jnp.float32), jnp.ones((2 * D,), jnp.float32)])
    wqkv = (params["wqkv"].astype(jnp.float32) * col_scale[None, :]
            ).astype(weight_dtype)

    # Matmul operands in weight_dtype (bf16 default: MXU-native, halves weight
    # DMA bytes and VMEM residency). LN params / biases stay f32 (applied to
    # f32 accumulators on the VPU). bf16 changes numerics vs the f32 reference
    # (covered by looser tolerance).
    wp = params["wp"].astype(weight_dtype)
    w1 = params["w1"].astype(weight_dtype)
    w2 = params["w2"].astype(weight_dtype)

    exact = jnp.dtype(weight_dtype) == jnp.dtype(jnp.float32)
    args = (x,
            params["g1"], params["b1"],
            wqkv,
            wp, params["bp"],
            params["g2"], params["b2"],
            w1, params["bb1"],
            w2, params["bb2"])

    try:
        call = _make_call(N, L, D, Hf, x.dtype, num_heads, exact,
                          weight_dtype, single_buffer_weights=True)
        return call(*args)
    except Exception:
        # Older JAX without BlockSpec(pipeline_mode=...): fall back to default
        # double-buffered weight specs (correctness unchanged, more VMEM).
        call = _make_call(N, L, D, Hf, x.dtype, num_heads, exact,
                          weight_dtype, single_buffer_weights=False)
        return call(*args)


def reference_encoder_layer(x, params, *, num_heads):
    """Pure-JAX f32 reference of the PyTorch forward for verification."""
    N, L, D = x.shape
    hd = D // num_heads
    scale = hd ** (-0.5)

    def ln(z, g, b):
        mu = jnp.mean(z, -1, keepdims=True)
        var = jnp.mean((z - mu) ** 2, -1, keepdims=True)
        return (z - mu) / jnp.sqrt(var + 1e-5) * g + b

    xn = ln(x, params["g1"], params["b1"])
    qkv = xn @ params["wqkv"]                              # (N, L, 3D)
    qkv = qkv.reshape(N, L, 3, num_heads, hd).transpose(2, 0, 3, 1, 4)
    q, k, v = qkv[0], qkv[1], qkv[2]                       # (N, H, L, hd)
    attn = (q @ jnp.swapaxes(k, -2, -1)) * scale
    attn = jax.nn.softmax(attn, axis=-1)
    ao = (attn @ v).transpose(0, 2, 1, 3).reshape(N, L, D)
    ao = ao @ params["wp"] + params["bp"]
    x = x + ao

    xn2 = ln(x, params["g2"], params["b2"])
    h1 = xn2 @ params["w1"] + params["bb1"]
    h1 = 0.5 * h1 * (1.0 + lax.erf(h1 / jnp.sqrt(2.0)))
    h2 = h1 @ params["w2"] + params["bb2"]
    return x + h2


if __name__ == "__main__":
    # Small shapes consistent with the module: tokens (N, L, D)
    N, L, D = 2, 8, 32
    num_heads = 4
    ffn_ratio = 4.0
    Hf = int(D * ffn_ratio)

    key = jax.random.PRNGKey(0)
    keys = jax.random.split(key, 12)

    def rnd(k, shape, s=0.05):
        return (s * jax.random.normal(k, shape)).astype(jnp.float32)

    params = {
        "g1":  1.0 + rnd(keys[0], (1, D)),
        "b1":  rnd(keys[1], (1, D)),
        "wqkv": rnd(keys[2], (D, 3 * D)),
        "wp":  rnd(keys[3], (D, D)),
        "bp":  rnd(keys[4], (1, D)),
        "g2":  1.0 + rnd(keys[5], (1, D)),
        "b2":  rnd(keys[6], (1, D)),
        "w1":  rnd(keys[7], (D, Hf)),
        "bb1": rnd(keys[8], (1, Hf)),
        "w2":  rnd(keys[9], (Hf, D)),
        "bb2": rnd(keys[10], (1, D)),
    }
    x = jax.random.normal(keys[11], (N, L, D), dtype=jnp.float32)

    ref = reference_encoder_layer(x, params, num_heads=num_heads)

    # Exact-semantics build (f32 matmul operands, exact softmax division).
    out_f32 = encoder_layer(x, params, num_heads=num_heads,
                            weight_dtype=jnp.float32)
    out_f32 = jax.block_until_ready(out_f32)
    assert out_f32.shape == (N, L, D)
    assert jnp.allclose(out_f32, ref, atol=1e-3, rtol=1e-3), (
        float(jnp.max(jnp.abs(out_f32 - ref))))

    # Optimized build (bf16 matmul operands, f32 accumulation): loose check.
    out_bf16 = encoder_layer(x, params, num_heads=num_heads,
                             weight_dtype=jnp.bfloat16)
    out_bf16 = jax.block_until_ready(out_bf16)
    assert out_bf16.shape == (N, L, D)
    assert jnp.allclose(out_bf16, ref, atol=2e-2, rtol=2e-2), (
        float(jnp.max(jnp.abs(out_bf16 - ref))))

    print("KERNEL_OK")
</pallas_src>

<mosaic_0001>
module attributes {stable_mosaic.version = 11 : i64} {
  func.func @encoder_layer_kernel(%arg0: i32, %arg1: memref<1x8x32xf32, #tpu.memory_space<vmem>>, %arg2: memref<1x32xf32, #tpu.memory_space<vmem>>, %arg3: memref<1x32xf32, #tpu.memory_space<vmem>>, %arg4: memref<32x96xf32, #tpu.memory_space<vmem>>, %arg5: memref<32x32xf32, #tpu.memory_space<vmem>>, %arg6: memref<1x32xf32, #tpu.memory_space<vmem>>, %arg7: memref<1x32xf32, #tpu.memory_space<vmem>>, %arg8: memref<1x32xf32, #tpu.memory_space<vmem>>, %arg9: memref<32x128xf32, #tpu.memory_space<vmem>>, %arg10: memref<1x128xf32, #tpu.memory_space<vmem>>, %arg11: memref<128x32xf32, #tpu.memory_space<vmem>>, %arg12: memref<1x32xf32, #tpu.memory_space<vmem>>, %arg13: memref<1x8x32xf32, #tpu.memory_space<vmem>>, %arg14: memref<8x32xf32, #tpu.memory_space<vmem>>) attributes {dimension_semantics = [#tpu.dimension_semantics<parallel>], iteration_bounds = array<i64: 2>, scalar_prefetch = 0 : i64, scratch_operands = 1 : i64, tpu.core_type = #tpu.core_type<tc>, window_params = [{transform_indices = @transform_0, window_bounds = array<i64: 1, 8, 32>}, {pipeline_mode = #tpu.pipeline_mode<synchronous>, transform_indices = @transform_1, window_bounds = array<i64: 1, 32>}, {pipeline_mode = #tpu.pipeline_mode<synchronous>, transform_indices = @transform_2, window_bounds = array<i64: 1, 32>}, {pipeline_mode = #tpu.pipeline_mode<synchronous>, transform_indices = @transform_3, window_bounds = array<i64: 32, 96>}, {pipeline_mode = #tpu.pipeline_mode<synchronous>, transform_indices = @transform_4, window_bounds = array<i64: 32, 32>}, {pipeline_mode = #tpu.pipeline_mode<synchronous>, transform_indices = @transform_5, window_bounds = array<i64: 1, 32>}, {pipeline_mode = #tpu.pipeline_mode<synchronous>, transform_indices = @transform_6, window_bounds = array<i64: 1, 32>}, {pipeline_mode = #tpu.pipeline_mode<synchronous>, transform_indices = @transform_7, window_bounds = array<i64: 1, 32>}, {pipeline_mode = #tpu.pipeline_mode<synchronous>, transform_indices = @transform_8, window_bounds = array<i64: 32, 128>}, {pipeline_mode = #tpu.pipeline_mode<synchronous>, transform_indices = @transform_9, window_bounds = array<i64: 1, 128>}, {pipeline_mode = #tpu.pipeline_mode<synchronous>, transform_indices = @transform_10, window_bounds = array<i64: 128, 32>}, {pipeline_mode = #tpu.pipeline_mode<synchronous>, transform_indices = @transform_11, window_bounds = array<i64: 1, 32>}, {transform_indices = @transform_12, window_bounds = array<i64: 1, 8, 32>}]} {
    %c0 = arith.constant 0 : index
    %c0_0 = arith.constant 0 : index
    %c0_1 = arith.constant 0 : index
    %0 = vector.load %arg1[%c0, %c0_0, %c0_1] : memref<1x8x32xf32, #tpu.memory_space<vmem>>, vector<1x8x32xf32>
    %1 = vector.shape_cast %0 : vector<1x8x32xf32> to vector<8x32xf32>
    %c0_2 = arith.constant 0 : index
    %c0_3 = arith.constant 0 : index
    %2 = vector.load %arg2[%c0_2, %c0_3] : memref<1x32xf32, #tpu.memory_space<vmem>>, vector<1x32xf32>
    %c0_4 = arith.constant 0 : index
    %c0_5 = arith.constant 0 : index
    %3 = vector.load %arg3[%c0_4, %c0_5] : memref<1x32xf32, #tpu.memory_space<vmem>>, vector<1x32xf32>
    %cst = arith.constant dense<0.000000e+00> : vector<8xf32>
    %4 = vector.multi_reduction <add>, %1, %cst [1] : vector<8x32xf32> to vector<8xf32>
    %5 = vector.shape_cast %4 : vector<8xf32> to vector<8x1xf32>
    %cst_6 = arith.constant 3.200000e+01 : f32
    %6 = vector.broadcast %cst_6 : f32 to vector<8x1xf32>
    %7 = arith.divf %5, %6 : vector<8x1xf32>
    %8 = vector.broadcast %7 : vector<8x1xf32> to vector<8x32xf32>
    %9 = arith.subf %1, %8 : vector<8x32xf32>
    %10 = arith.mulf %9, %9 : vector<8x32xf32>
    %cst_7 = arith.constant dense<0.000000e+00> : vector<8xf32>
    %11 = vector.multi_reduction <add>, %10, %cst_7 [1] : vector<8x32xf32> to vector<8xf32>
    %12 = vector.shape_cast %11 : vector<8xf32> to vector<8x1xf32>
    %cst_8 = arith.constant 3.200000e+01 : f32
    %13 = vector.broadcast %cst_8 : f32 to vector<8x1xf32>
    %14 = arith.divf %12, %13 : vector<8x1xf32>
    %15 = vector.broadcast %7 : vector<8x1xf32> to vector<8x32xf32>
    %16 = arith.subf %1, %15 : vector<8x32xf32>
    %cst_9 = arith.constant 9.99999974E-6 : f32
    %17 = vector.broadcast %cst_9 : f32 to vector<8x1xf32>
    %18 = arith.addf %14, %17 : vector<8x1xf32>
    %19 = math.rsqrt %18 : vector<8x1xf32>
    %20 = vector.broadcast %19 : vector<8x1xf32> to vector<8x32xf32>
    %21 = arith.mulf %16, %20 : vector<8x32xf32>
    %22 = vector.broadcast %2 : vector<1x32xf32> to vector<8x32xf32>
    %23 = arith.mulf %21, %22 : vector<8x32xf32>
    %24 = vector.broadcast %3 : vector<1x32xf32> to vector<8x32xf32>
    %25 = arith.addf %23, %24 : vector<8x32xf32>
    %c0_10 = arith.constant 0 : index
    %c0_11 = arith.constant 0 : index
    %26 = vector.load %arg4[%c0_10, %c0_11] : memref<32x96xf32, #tpu.memory_space<vmem>>, vector<32x96xf32>
    %cst_12 = arith.constant dense<0.000000e+00> : vector<8x96xf32>
    %27 = tpu.matmul %25, %26, %cst_12 {dimension_numbers = #tpu.dot_dimension_numbers<[1], [0], [0], [1], [0, 0, 1, 1], [], []>} : vector<8x32xf32>, vector<32x96xf32>, vector<8x96xf32> -> vector<8x96xf32>
    %28 = vector.extract_strided_slice %27 {offsets = [0, 0], sizes = [8, 8], strides = [1, 1]} : vector<8x96xf32> to vector<8x8xf32>
    %29 = vector.extract_strided_slice %27 {offsets = [0, 8], sizes = [8, 8], strides = [1, 1]} : vector<8x96xf32> to vector<8x8xf32>
    %30 = vector.extract_strided_slice %27 {offsets = [0, 16], sizes = [8, 8], strides = [1, 1]} : vector<8x96xf32> to vector<8x8xf32>
    %31 = vector.extract_strided_slice %27 {offsets = [0, 24], sizes = [8, 8], strides = [1, 1]} : vector<8x96xf32> to vector<8x8xf32>
    %32 = vector.extract_strided_slice %27 {offsets = [0, 32], sizes = [8, 8], strides = [1, 1]} : vector<8x96xf32> to vector<8x8xf32>
    %33 = vector.extract_strided_slice %27 {offsets = [0, 40], sizes = [8, 8], strides = [1, 1]} : vector<8x96xf32> to vector<8x8xf32>
    %34 = vector.extract_strided_slice %27 {offsets = [0, 48], sizes = [8, 8], strides = [1, 1]} : vector<8x96xf32> to vector<8x8xf32>
    %35 = vector.extract_strided_slice %27 {offsets = [0, 56], sizes = [8, 8], strides = [1, 1]} : vector<8x96xf32> to vector<8x8xf32>
    %36 = vector.extract_strided_slice %27 {offsets = [0, 64], sizes = [8, 8], strides = [1, 1]} : vector<8x96xf32> to vector<8x8xf32>
    %37 = vector.extract_strided_slice %27 {offsets = [0, 72], sizes = [8, 8], strides = [1, 1]} : vector<8x96xf32> to vector<8x8xf32>
    %38 = vector.extract_strided_slice %27 {offsets = [0, 80], sizes = [8, 8], strides = [1, 1]} : vector<8x96xf32> to vector<8x8xf32>
    %39 = vector.extract_strided_slice %27 {offsets = [0, 88], sizes = [8, 8], strides = [1, 1]} : vector<8x96xf32> to vector<8x8xf32>
    %40 = vector.shape_cast %28 : vector<8x8xf32> to vector<1x8x8xf32>
    %41 = vector.shape_cast %29 : vector<8x8xf32> to vector<1x8x8xf32>
    %42 = vector.shape_cast %30 : vector<8x8xf32> to vector<1x8x8xf32>
    %43 = vector.shape_cast %31 : vector<8x8xf32> to vector<1x8x8xf32>
    %44 = vector.shape_cast %32 : vector<8x8xf32> to vector<1x8x8xf32>
    %45 = vector.shape_cast %33 : vector<8x8xf32> to vector<1x8x8xf32>
    %46 = vector.shape_cast %34 : vector<8x8xf32> to vector<1x8x8xf32>
    %47 = vector.shape_cast %35 : vector<8x8xf32> to vector<1x8x8xf32>
    %48 = vector.shape_cast %36 : vector<8x8xf32> to vector<1x8x8xf32>
    %49 = vector.shape_cast %37 : vector<8x8xf32> to vector<1x8x8xf32>
    %50 = vector.shape_cast %38 : vector<8x8xf32> to vector<1x8x8xf32>
    %51 = vector.shape_cast %39 : vector<8x8xf32> to vector<1x8x8xf32>
    %52 = tpu.concatenate %40, %41, %42, %43, %44, %45, %46, %47, %48, %49, %50, %51 in 0 : vector<1x8x8xf32>, vector<1x8x8xf32>, vector<1x8x8xf32>, vector<1x8x8xf32>, vector<1x8x8xf32>, vector<1x8x8xf32>, vector<1x8x8xf32>, vector<1x8x8xf32>, vector<1x8x8xf32>, vector<1x8x8xf32>, vector<1x8x8xf32>, vector<1x8x8xf32> -> vector<12x8x8xf32>
    %53 = vector.extract_strided_slice %52 {offsets = [0, 0, 0], sizes = [4, 8, 8], strides = [1, 1, 1]} : vector<12x8x8xf32> to vector<4x8x8xf32>
    %54 = vector.extract_strided_slice %52 {offsets = [4, 0, 0], sizes = [4, 8, 8], strides = [1, 1, 1]} : vector<12x8x8xf32> to vector<4x8x8xf32>
    %55 = vector.extract_strided_slice %52 {offsets = [8, 0, 0], sizes = [4, 8, 8], strides = [1, 1, 1]} : vector<12x8x8xf32> to vector<4x8x8xf32>
    "tpu.trace_start"() <{level = 10 : i32, message = "hld,hmd->hlm"}> : () -> ()
    %cst_13 = arith.constant dense<0.000000e+00> : vector<4x8x8xf32>
    %56 = tpu.matmul %53, %54, %cst_13 {dimension_numbers = #tpu.dot_dimension_numbers<[2], [2], [1], [1], [0, 0, 0, 1, 1, 1], [0], [0]>} : vector<4x8x8xf32>, vector<4x8x8xf32>, vector<4x8x8xf32> -> vector<4x8x8xf32>
    "tpu.trace_stop"() : () -> ()
    %cst_14 = arith.constant dense<0xFF800000> : vector<4x8xf32>
    %57 = vector.multi_reduction <maximumf>, %56, %cst_14 [2] : vector<4x8x8xf32> to vector<4x8xf32>
    %58 = vector.shape_cast %57 : vector<4x8xf32> to vector<4x8x1xf32>
    %59 = vector.broadcast %58 : vector<4x8x1xf32> to vector<4x8x8xf32>
    %60 = arith.subf %56, %59 : vector<4x8x8xf32>
    %61 = math.exp %60 : vector<4x8x8xf32>
    %cst_15 = arith.constant dense<0.000000e+00> : vector<4x8xf32>
    %62 = vector.multi_reduction <add>, %61, %cst_15 [2] : vector<4x8x8xf32> to vector<4x8xf32>
    %63 = vector.shape_cast %62 : vector<4x8xf32> to vector<4x8x1xf32>
    "tpu.trace_start"() <{level = 10 : i32, message = "hlm,hmd->hld"}> : () -> ()
    %cst_16 = arith.constant dense<0.000000e+00> : vector<4x8x8xf32>
    %64 = tpu.matmul %61, %55, %cst_16 {dimension_numbers = #tpu.dot_dimension_numbers<[2], [1], [1], [2], [0, 0, 0, 1, 1, 2], [0], [0]>} : vector<4x8x8xf32>, vector<4x8x8xf32>, vector<4x8x8xf32> -> vector<4x8x8xf32>
    "tpu.trace_stop"() : () -> ()
    %65 = vector.broadcast %63 : vector<4x8x1xf32> to vector<4x8x8xf32>
    %66 = arith.divf %64, %65 : vector<4x8x8xf32>
    %67 = vector.extract_strided_slice %66 {offsets = [0, 0, 0], sizes = [1, 8, 8], strides = [1, 1, 1]} : vector<4x8x8xf32> to vector<1x8x8xf32>
    %68 = vector.shape_cast %67 : vector<1x8x8xf32> to vector<8x8xf32>
    %c0_17 = arith.constant 0 : index
    %c0_18 = arith.constant 0 : index
    %69 = vector.load %arg14[%c0_17, %c0_18] : memref<8x32xf32, #tpu.memory_space<vmem>>, vector<8x8xf32>
    tpu.vector_store %arg14[%c0_17, %c0_18], %68 {strides = array<i32>} : memref<8x32xf32, #tpu.memory_space<vmem>>, vector<8x8xf32>,
    %70 = vector.extract_strided_slice %66 {offsets = [1, 0, 0], sizes = [1, 8, 8], strides = [1, 1, 1]} : vector<4x8x8xf32> to vector<1x8x8xf32>
    %71 = vector.shape_cast %70 : vector<1x8x8xf32> to vector<8x8xf32>
    %c0_19 = arith.constant 0 : index
    %c8 = arith.constant 8 : index
    %72 = vector.load %arg14[%c0_19, %c8] : memref<8x32xf32, #tpu.memory_space<vmem>>, vector<8x8xf32>
    tpu.vector_store %arg14[%c0_19, %c8], %71 {strides = array<i32>} : memref<8x32xf32, #tpu.memory_space<vmem>>, vector<8x8xf32>,
    %73 = vector.extract_strided_slice %66 {offsets = [2, 0, 0], sizes = [1, 8, 8], strides = [1, 1, 1]} : vector<4x8x8xf32> to vector<1x8x8xf32>
    %74 = vector.shape_cast %73 : vector<1x8x8xf32> to vector<8x8xf32>
    %c0_20 = arith.constant 0 : index
    %c16 = arith.constant 16 : index
    %75 = vector.load %arg14[%c0_20, %c16] : memref<8x32xf32, #tpu.memory_space<vmem>>, vector<8x8xf32>
    tpu.vector_store %arg14[%c0_20, %c16], %74 {strides = array<i32>} : memref<8x32xf32, #tpu.memory_space<vmem>>, vector<8x8xf32>,
    %76 = vector.extract_strided_slice %66 {offsets = [3, 0, 0], sizes = [1, 8, 8], strides = [1, 1, 1]} : vector<4x8x8xf32> to vector<1x8x8xf32>
    %77 = vector.shape_cast %76 : vector<1x8x8xf32> to vector<8x8xf32>
    %c0_21 = arith.constant 0 : index
    %c24 = arith.constant 24 : index
    %78 = vector.load %arg14[%c0_21, %c24] : memref<8x32xf32, #tpu.memory_space<vmem>>, vector<8x8xf32>
    tpu.vector_store %arg14[%c0_21, %c24], %77 {strides = array<i32>} : memref<8x32xf32, #tpu.memory_space<vmem>>, vector<8x8xf32>,
    %c0_22 = arith.constant 0 : index
    %c0_23 = arith.constant 0 : index
    %79 = vector.load %arg14[%c0_22, %c0_23] : memref<8x32xf32, #tpu.memory_space<vmem>>, vector<8x32xf32>
    %c0_24 = arith.constant 0 : index
    %c0_25 = arith.constant 0 : index
    %80 = vector.load %arg5[%c0_24, %c0_25] : memref<32x32xf32, #tpu.memory_space<vmem>>, vector<32x32xf32>
    %cst_26 = arith.constant dense<0.000000e+00> : vector<8x32xf32>
    %81 = tpu.matmul %79, %80, %cst_26 {dimension_numbers = #tpu.dot_dimension_numbers<[1], [0], [0], [1], [0, 0, 1, 1], [], []>} : vector<8x32xf32>, vector<32x32xf32>, vector<8x32xf32> -> vector<8x32xf32>
    %c0_27 = arith.constant 0 : index
    %c0_28 = arith.constant 0 : index
    %82 = vector.load %arg6[%c0_27, %c0_28] : memref<1x32xf32, #tpu.memory_space<vmem>>, vector<1x32xf32>
    %83 = vector.broadcast %82 : vector<1x32xf32> to vector<8x32xf32>
    %84 = arith.addf %81, %83 : vector<8x32xf32>
    %85 = arith.addf %1, %84 : vector<8x32xf32>
    %c0_29 = arith.constant 0 : index
    %c0_30 = arith.constant 0 : index
    %86 = vector.load %arg7[%c0_29, %c0_30] : memref<1x32xf32, #tpu.memory_space<vmem>>, vector<1x32xf32>
    %c0_31 = arith.constant 0 : index
    %c0_32 = arith.constant 0 : index
    %87 = vector.load %arg8[%c0_31, %c0_32] : memref<1x32xf32, #tpu.memory_space<vmem>>, vector<1x32xf32>
    %cst_33 = arith.constant dense<0.000000e+00> : vector<8xf32>
    %88 = vector.multi_reduction <add>, %85, %cst_33 [1] : vector<8x32xf32> to vector<8xf32>
    %89 = vector.shape_cast %88 : vector<8xf32> to vector<8x1xf32>
    %cst_34 = arith.constant 3.200000e+01 : f32
    %90 = vector.broadcast %cst_34 : f32 to vector<8x1xf32>
    %91 = arith.divf %89, %90 : vector<8x1xf32>
    %92 = vector.broadcast %91 : vector<8x1xf32> to vector<8x32xf32>
    %93 = arith.subf %85, %92 : vector<8x32xf32>
    %94 = arith.mulf %93, %93 : vector<8x32xf32>
    %cst_35 = arith.constant dense<0.000000e+00> : vector<8xf32>
    %95 = vector.multi_reduction <add>, %94, %cst_35 [1] : vector<8x32xf32> to vector<8xf32>
    %96 = vector.shape_cast %95 : vector<8xf32> to vector<8x1xf32>
    %cst_36 = arith.constant 3.200000e+01 : f32
    %97 = vector.broadcast %cst_36 : f32 to vector<8x1xf32>
    %98 = arith.divf %96, %97 : vector<8x1xf32>
    %99 = vector.broadcast %91 : vector<8x1xf32> to vector<8x32xf32>
    %100 = arith.subf %85, %99 : vector<8x32xf32>
    %cst_37 = arith.constant 9.99999974E-6 : f32
    %101 = vector.broadcast %cst_37 : f32 to vector<8x1xf32>
    %102 = arith.addf %98, %101 : vector<8x1xf32>
    %103 = math.rsqrt %102 : vector<8x1xf32>
    %104 = vector.broadcast %103 : vector<8x1xf32> to vector<8x32xf32>
    %105 = arith.mulf %100, %104 : vector<8x32xf32>
    %106 = vector.broadcast %86 : vector<1x32xf32> to vector<8x32xf32>
    %107 = arith.mulf %105, %106 : vector<8x32xf32>
    %108 = vector.broadcast %87 : vector<1x32xf32> to vector<8x32xf32>
    %109 = arith.addf %107, %108 : vector<8x32xf32>
    %c0_38 = arith.constant 0 : index
    %c0_39 = arith.constant 0 : index
    %110 = vector.load %arg9[%c0_38, %c0_39] : memref<32x128xf32, #tpu.memory_space<vmem>>, vector<32x128xf32>
    %cst_40 = arith.constant dense<0.000000e+00> : vector<8x128xf32>
    %111 = tpu.matmul %109, %110, %cst_40 {dimension_numbers = #tpu.dot_dimension_numbers<[1], [0], [0], [1], [0, 0, 1, 1], [], []>} : vector<8x32xf32>, vector<32x128xf32>, vector<8x128xf32> -> vector<8x128xf32>
    %c0_41 = arith.constant 0 : index
    %c0_42 = arith.constant 0 : index
    %112 = vector.load %arg10[%c0_41, %c0_42] : memref<1x128xf32, #tpu.memory_space<vmem>>, vector<1x128xf32>
    %113 = vector.broadcast %112 : vector<1x128xf32> to vector<8x128xf32>
    %114 = arith.addf %111, %113 : vector<8x128xf32>
    %cst_43 = arith.constant 5.000000e-01 : f32
    %115 = vector.broadcast %cst_43 : f32 to vector<8x128xf32>
    %116 = arith.mulf %115, %114 : vector<8x128xf32>
    %cst_44 = arith.constant 0.707106769 : f32
    %117 = vector.broadcast %cst_44 : f32 to vector<8x128xf32>
    %118 = arith.mulf %114, %117 : vector<8x128xf32>
    %119 = math.erf %118 : vector<8x128xf32>
    %cst_45 = arith.constant 1.000000e+00 : f32
    %120 = vector.broadcast %cst_45 : f32 to vector<8x128xf32>
    %121 = arith.addf %120, %119 : vector<8x128xf32>
    %122 = arith.mulf %116, %121 : vector<8x128xf32>
    %c0_46 = arith.constant 0 : index
    %c0_47 = arith.constant 0 : index
    %123 = vector.load %arg11[%c0_46, %c0_47] : memref<128x32xf32, #tpu.memory_space<vmem>>, vector<128x32xf32>
    %cst_48 = arith.constant dense<0.000000e+00> : vector<8x32xf32>
    %124 = tpu.matmul %122, %123, %cst_48 {dimension_numbers = #tpu.dot_dimension_numbers<[1], [0], [0], [1], [0, 0, 1, 1], [], []>} : vector<8x128xf32>, vector<128x32xf32>, vector<8x32xf32> -> vector<8x32xf32>
    %c0_49 = arith.constant 0 : index
    %c0_50 = arith.constant 0 : index
    %125 = vector.load %arg12[%c0_49, %c0_50] : memref<1x32xf32, #tpu.memory_space<vmem>>, vector<1x32xf32>
    %126 = vector.broadcast %125 : vector<1x32xf32> to vector<8x32xf32>
    %127 = arith.addf %124, %126 : vector<8x32xf32>
    %128 = arith.addf %85, %127 : vector<8x32xf32>
    %c0_51 = arith.constant 0 : index
    %c0_52 = arith.constant 0 : index
    %c0_53 = arith.constant 0 : index
    %129 = vector.load %arg13[%c0_51, %c0_52, %c0_53] : memref<1x8x32xf32, #tpu.memory_space<vmem>>, vector<1x8x32xf32>
    %130 = vector.shape_cast %129 : vector<1x8x32xf32> to vector<8x32xf32>
    %131 = vector.shape_cast %128 : vector<8x32xf32> to vector<1x8x32xf32>
    tpu.vector_store %arg13[%c0_51, %c0_52, %c0_53], %131 {strides = array<i32>} : memref<1x8x32xf32, #tpu.memory_space<vmem>>, vector<1x8x32xf32>,
    return
  }
  func.func @transform_0(%arg0: i32) -> (i32, i32, i32) {
    %c0_i32 = arith.constant 0 : i32
    %c0_i32_0 = arith.constant 0 : i32
    %c0_i32_1 = arith.constant 0 : i32
    return %arg0, %c0_i32, %c0_i32_0 : i32, i32, i32
  }
  func.func @transform_1(%arg0: i32) -> (i32, i32) {
    %c0_i32 = arith.constant 0 : i32
    %c0_i32_0 = arith.constant 0 : i32
    %c0_i32_1 = arith.constant 0 : i32
    return %c0_i32, %c0_i32_0 : i32, i32
  }
  func.func @transform_2(%arg0: i32) -> (i32, i32) {
    %c0_i32 = arith.constant 0 : i32
    %c0_i32_0 = arith.constant 0 : i32
    %c0_i32_1 = arith.constant 0 : i32
    return %c0_i32, %c0_i32_0 : i32, i32
  }
  func.func @transform_3(%arg0: i32) -> (i32, i32) {
    %c0_i32 = arith.constant 0 : i32
    %c0_i32_0 = arith.constant 0 : i32
    %c0_i32_1 = arith.constant 0 : i32
    return %c0_i32, %c0_i32_0 : i32, i32
  }
  func.func @transform_4(%arg0: i32) -> (i32, i32) {
    %c0_i32 = arith.constant 0 : i32
    %c0_i32_0 = arith.constant 0 : i32
    %c0_i32_1 = arith.constant 0 : i32
    return %c0_i32, %c0_i32_0 : i32, i32
  }
  func.func @transform_5(%arg0: i32) -> (i32, i32) {
    %c0_i32 = arith.constant 0 : i32
    %c0_i32_0 = arith.constant 0 : i32
    %c0_i32_1 = arith.constant 0 : i32
    return %c0_i32, %c0_i32_0 : i32, i32
  }
  func.func @transform_6(%arg0: i32) -> (i32, i32) {
    %c0_i32 = arith.constant 0 : i32
    %c0_i32_0 = arith.constant 0 : i32
    %c0_i32_1 = arith.constant 0 : i32
    return %c0_i32, %c0_i32_0 : i32, i32
  }
  func.func @transform_7(%arg0: i32) -> (i32, i32) {
    %c0_i32 = arith.constant 0 : i32
    %c0_i32_0 = arith.constant 0 : i32
    %c0_i32_1 = arith.constant 0 : i32
    return %c0_i32, %c0_i32_0 : i32, i32
  }
  func.func @transform_8(%arg0: i32) -> (i32, i32) {
    %c0_i32 = arith.constant 0 : i32
    %c0_i32_0 = arith.constant 0 : i32
    %c0_i32_1 = arith.constant 0 : i32
    return %c0_i32, %c0_i32_0 : i32, i32
  }
  func.func @transform_9(%arg0: i32) -> (i32, i32) {
    %c0_i32 = arith.constant 0 : i32
    %c0_i32_0 = arith.constant 0 : i32
    %c0_i32_1 = arith.constant 0 : i32
    return %c0_i32, %c0_i32_0 : i32, i32
  }
  func.func @transform_10(%arg0: i32) -> (i32, i32) {
    %c0_i32 = arith.constant 0 : i32
    %c0_i32_0 = arith.constant 0 : i32
    %c0_i32_1 = arith.constant 0 : i32
    return %c0_i32, %c0_i32_0 : i32, i32
  }
  func.func @transform_11(%arg0: i32) -> (i32, i32) {
    %c0_i32 = arith.constant 0 : i32
    %c0_i32_0 = arith.constant 0 : i32
    %c0_i32_1 = arith.constant 0 : i32
    return %c0_i32, %c0_i32_0 : i32, i32
  }
  func.func @transform_12(%arg0: i32) -> (i32, i32, i32) {
    %c0_i32 = arith.constant 0 : i32
    %c0_i32_0 = arith.constant 0 : i32
    %c0_i32_1 = arith.constant 0 : i32
    return %arg0, %c0_i32, %c0_i32_0 : i32, i32, i32
  }
}

module attributes {stable_mosaic.version = 11 : i64} {
  func.func @encoder_layer_kernel(%arg0: i32, %arg1: memref<1x8x32xf32, #tpu.memory_space<vmem>>, %arg2: memref<1x32xf32, #tpu.memory_space<vmem>>, %arg3: memref<1x32xf32, #tpu.memory_space<vmem>>, %arg4: memref<32x96xf32, #tpu.memory_space<vmem>>, %arg5: memref<32x32xf32, #tpu.memory_space<vmem>>, %arg6: memref<1x32xf32, #tpu.memory_space<vmem>>, %arg7: memref<1x32xf32, #tpu.memory_space<vmem>>, %arg8: memref<1x32xf32, #tpu.memory_space<vmem>>, %arg9: memref<32x128xf32, #tpu.memory_space<vmem>>, %arg10: memref<1x128xf32, #tpu.memory_space<vmem>>, %arg11: memref<128x32xf32, #tpu.memory_space<vmem>>, %arg12: memref<1x32xf32, #tpu.memory_space<vmem>>, %arg13: memref<1x8x32xf32, #tpu.memory_space<vmem>>, %arg14: memref<8x32xf32, #tpu.memory_space<vmem>>) attributes {dimension_semantics = [#tpu.dimension_semantics<parallel>], iteration_bounds = array<i64: 2>, scalar_prefetch = 0 : i64, scratch_operands = 1 : i64, tpu.core_type = #tpu.core_type<tc>, window_params = [{transform_indices = @transform_0, window_bounds = array<i64: 1, 8, 32>}, {pipeline_mode = #tpu.pipeline_mode<synchronous>, transform_indices = @transform_1, window_bounds = array<i64: 1, 32>}, {pipeline_mode = #tpu.pipeline_mode<synchronous>, transform_indices = @transform_2, window_bounds = array<i64: 1, 32>}, {pipeline_mode = #tpu.pipeline_mode<synchronous>, transform_indices = @transform_3, window_bounds = array<i64: 32, 96>}, {pipeline_mode = #tpu.pipeline_mode<synchronous>, transform_indices = @transform_4, window_bounds = array<i64: 32, 32>}, {pipeline_mode = #tpu.pipeline_mode<synchronous>, transform_indices = @transform_5, window_bounds = array<i64: 1, 32>}, {pipeline_mode = #tpu.pipeline_mode<synchronous>, transform_indices = @transform_6, window_bounds = array<i64: 1, 32>}, {pipeline_mode = #tpu.pipeline_mode<synchronous>, transform_indices = @transform_7, window_bounds = array<i64: 1, 32>}, {pipeline_mode = #tpu.pipeline_mode<synchronous>, transform_indices = @transform_8, window_bounds = array<i64: 32, 128>}, {pipeline_mode = #tpu.pipeline_mode<synchronous>, transform_indices = @transform_9, window_bounds = array<i64: 1, 128>}, {pipeline_mode = #tpu.pipeline_mode<synchronous>, transform_indices = @transform_10, window_bounds = array<i64: 128, 32>}, {pipeline_mode = #tpu.pipeline_mode<synchronous>, transform_indices = @transform_11, window_bounds = array<i64: 1, 32>}, {transform_indices = @transform_12, window_bounds = array<i64: 1, 8, 32>}]} {
    %c0 = arith.constant 0 : index
    %c0_0 = arith.constant 0 : index
    %c0_1 = arith.constant 0 : index
    %0 = vector.load %arg1[%c0, %c0_0, %c0_1] : memref<1x8x32xf32, #tpu.memory_space<vmem>>, vector<1x8x32xf32>
    %1 = vector.shape_cast %0 : vector<1x8x32xf32> to vector<8x32xf32>
    %c0_2 = arith.constant 0 : index
    %c0_3 = arith.constant 0 : index
    %2 = vector.load %arg2[%c0_2, %c0_3] : memref<1x32xf32, #tpu.memory_space<vmem>>, vector<1x32xf32>
    %c0_4 = arith.constant 0 : index
    %c0_5 = arith.constant 0 : index
    %3 = vector.load %arg3[%c0_4, %c0_5] : memref<1x32xf32, #tpu.memory_space<vmem>>, vector<1x32xf32>
    %cst = arith.constant dense<0.000000e+00> : vector<8xf32>
    %4 = vector.multi_reduction <add>, %1, %cst [1] : vector<8x32xf32> to vector<8xf32>
    %5 = vector.shape_cast %4 : vector<8xf32> to vector<8x1xf32>
    %cst_6 = arith.constant 3.200000e+01 : f32
    %6 = vector.broadcast %cst_6 : f32 to vector<8x1xf32>
    %7 = arith.divf %5, %6 : vector<8x1xf32>
    %8 = vector.broadcast %7 : vector<8x1xf32> to vector<8x32xf32>
    %9 = arith.subf %1, %8 : vector<8x32xf32>
    %10 = arith.mulf %9, %9 : vector<8x32xf32>
    %cst_7 = arith.constant dense<0.000000e+00> : vector<8xf32>
    %11 = vector.multi_reduction <add>, %10, %cst_7 [1] : vector<8x32xf32> to vector<8xf32>
    %12 = vector.shape_cast %11 : vector<8xf32> to vector<8x1xf32>
    %cst_8 = arith.constant 3.200000e+01 : f32
    %13 = vector.broadcast %cst_8 : f32 to vector<8x1xf32>
    %14 = arith.divf %12, %13 : vector<8x1xf32>
    %15 = vector.broadcast %7 : vector<8x1xf32> to vector<8x32xf32>
    %16 = arith.subf %1, %15 : vector<8x32xf32>
    %cst_9 = arith.constant 9.99999974E-6 : f32
    %17 = vector.broadcast %cst_9 : f32 to vector<8x1xf32>
    %18 = arith.addf %14, %17 : vector<8x1xf32>
    %19 = math.rsqrt %18 : vector<8x1xf32>
    %20 = vector.broadcast %19 : vector<8x1xf32> to vector<8x32xf32>
    %21 = arith.mulf %16, %20 : vector<8x32xf32>
    %22 = vector.broadcast %2 : vector<1x32xf32> to vector<8x32xf32>
    %23 = arith.mulf %21, %22 : vector<8x32xf32>
    %24 = vector.broadcast %3 : vector<1x32xf32> to vector<8x32xf32>
    %25 = arith.addf %23, %24 : vector<8x32xf32>
    %c0_10 = arith.constant 0 : index
    %c0_11 = arith.constant 0 : index
    %26 = vector.load %arg4[%c0_10, %c0_11] : memref<32x96xf32, #tpu.memory_space<vmem>>, vector<32x96xf32>
    %cst_12 = arith.constant dense<0.000000e+00> : vector<8x96xf32>
    %27 = tpu.matmul %25, %26, %cst_12 {dimension_numbers = #tpu.dot_dimension_numbers<[1], [0], [0], [1], [0, 0, 1, 1], [], []>} : vector<8x32xf32>, vector<32x96xf32>, vector<8x96xf32> -> vector<8x96xf32>
    %28 = vector.extract_strided_slice %27 {offsets = [0, 0], sizes = [8, 8], strides = [1, 1]} : vector<8x96xf32> to vector<8x8xf32>
    %29 = vector.extract_strided_slice %27 {offsets = [0, 8], sizes = [8, 8], strides = [1, 1]} : vector<8x96xf32> to vector<8x8xf32>
    %30 = vector.extract_strided_slice %27 {offsets = [0, 16], sizes = [8, 8], strides = [1, 1]} : vector<8x96xf32> to vector<8x8xf32>
    %31 = vector.extract_strided_slice %27 {offsets = [0, 24], sizes = [8, 8], strides = [1, 1]} : vector<8x96xf32> to vector<8x8xf32>
    %32 = vector.extract_strided_slice %27 {offsets = [0, 32], sizes = [8, 8], strides = [1, 1]} : vector<8x96xf32> to vector<8x8xf32>
    %33 = vector.extract_strided_slice %27 {offsets = [0, 40], sizes = [8, 8], strides = [1, 1]} : vector<8x96xf32> to vector<8x8xf32>
    %34 = vector.extract_strided_slice %27 {offsets = [0, 48], sizes = [8, 8], strides = [1, 1]} : vector<8x96xf32> to vector<8x8xf32>
    %35 = vector.extract_strided_slice %27 {offsets = [0, 56], sizes = [8, 8], strides = [1, 1]} : vector<8x96xf32> to vector<8x8xf32>
    %36 = vector.extract_strided_slice %27 {offsets = [0, 64], sizes = [8, 8], strides = [1, 1]} : vector<8x96xf32> to vector<8x8xf32>
    %37 = vector.extract_strided_slice %27 {offsets = [0, 72], sizes = [8, 8], strides = [1, 1]} : vector<8x96xf32> to vector<8x8xf32>
    %38 = vector.extract_strided_slice %27 {offsets = [0, 80], sizes = [8, 8], strides = [1, 1]} : vector<8x96xf32> to vector<8x8xf32>
    %39 = vector.extract_strided_slice %27 {offsets = [0, 88], sizes = [8, 8], strides = [1, 1]} : vector<8x96xf32> to vector<8x8xf32>
    %40 = vector.shape_cast %28 : vector<8x8xf32> to vector<1x8x8xf32>
    %41 = vector.shape_cast %29 : vector<8x8xf32> to vector<1x8x8xf32>
    %42 = vector.shape_cast %30 : vector<8x8xf32> to vector<1x8x8xf32>
    %43 = vector.shape_cast %31 : vector<8x8xf32> to vector<1x8x8xf32>
    %44 = vector.shape_cast %32 : vector<8x8xf32> to vector<1x8x8xf32>
    %45 = vector.shape_cast %33 : vector<8x8xf32> to vector<1x8x8xf32>
    %46 = vector.shape_cast %34 : vector<8x8xf32> to vector<1x8x8xf32>
    %47 = vector.shape_cast %35 : vector<8x8xf32> to vector<1x8x8xf32>
    %48 = vector.shape_cast %36 : vector<8x8xf32> to vector<1x8x8xf32>
    %49 = vector.shape_cast %37 : vector<8x8xf32> to vector<1x8x8xf32>
    %50 = vector.shape_cast %38 : vector<8x8xf32> to vector<1x8x8xf32>
    %51 = vector.shape_cast %39 : vector<8x8xf32> to vector<1x8x8xf32>
    %52 = tpu.concatenate %40, %41, %42, %43, %44, %45, %46, %47, %48, %49, %50, %51 in 0 : vector<1x8x8xf32>, vector<1x8x8xf32>, vector<1x8x8xf32>, vector<1x8x8xf32>, vector<1x8x8xf32>, vector<1x8x8xf32>, vector<1x8x8xf32>, vector<1x8x8xf32>, vector<1x8x8xf32>, vector<1x8x8xf32>, vector<1x8x8xf32>, vector<1x8x8xf32> -> vector<12x8x8xf32>
    %53 = vector.extract_strided_slice %52 {offsets = [0, 0, 0], sizes = [4, 8, 8], strides = [1, 1, 1]} : vector<12x8x8xf32> to vector<4x8x8xf32>
    %54 = vector.extract_strided_slice %52 {offsets = [4, 0, 0], sizes = [4, 8, 8], strides = [1, 1, 1]} : vector<12x8x8xf32> to vector<4x8x8xf32>
    %55 = vector.extract_strided_slice %52 {offsets = [8, 0, 0], sizes = [4, 8, 8], strides = [1, 1, 1]} : vector<12x8x8xf32> to vector<4x8x8xf32>
    "tpu.trace_start"() <{level = 10 : i32, message = "hld,hmd->hlm"}> : () -> ()
    %cst_13 = arith.constant dense<0.000000e+00> : vector<4x8x8xf32>
    %56 = tpu.matmul %53, %54, %cst_13 {dimension_numbers = #tpu.dot_dimension_numbers<[2], [2], [1], [1], [0, 0, 0, 1, 1, 1], [0], [0]>} : vector<4x8x8xf32>, vector<4x8x8xf32>, vector<4x8x8xf32> -> vector<4x8x8xf32>
    "tpu.trace_stop"() : () -> ()
    %cst_14 = arith.constant dense<0xFF800000> : vector<4x8xf32>
    %57 = vector.multi_reduction <maximumf>, %56, %cst_14 [2] : vector<4x8x8xf32> to vector<4x8xf32>
    %58 = vector.shape_cast %57 : vector<4x8xf32> to vector<4x8x1xf32>
    %59 = vector.broadcast %58 : vector<4x8x1xf32> to vector<4x8x8xf32>
    %60 = arith.subf %56, %59 : vector<4x8x8xf32>
    %61 = math.exp %60 : vector<4x8x8xf32>
    %cst_15 = arith.constant dense<0.000000e+00> : vector<4x8xf32>
    %62 = vector.multi_reduction <add>, %61, %cst_15 [2] : vector<4x8x8xf32> to vector<4x8xf32>
    %63 = vector.shape_cast %62 : vector<4x8xf32> to vector<4x8x1xf32>
    "tpu.trace_start"() <{level = 10 : i32, message = "hlm,hmd->hld"}> : () -> ()
    %cst_16 = arith.constant dense<0.000000e+00> : vector<4x8x8xf32>
    %64 = tpu.matmul %61, %55, %cst_16 {dimension_numbers = #tpu.dot_dimension_numbers<[2], [1], [1], [2], [0, 0, 0, 1, 1, 2], [0], [0]>} : vector<4x8x8xf32>, vector<4x8x8xf32>, vector<4x8x8xf32> -> vector<4x8x8xf32>
    "tpu.trace_stop"() : () -> ()
    %65 = vector.broadcast %63 : vector<4x8x1xf32> to vector<4x8x8xf32>
    %66 = arith.divf %64, %65 : vector<4x8x8xf32>
    %67 = vector.extract_strided_slice %66 {offsets = [0, 0, 0], sizes = [1, 8, 8], strides = [1, 1, 1]} : vector<4x8x8xf32> to vector<1x8x8xf32>
    %68 = vector.shape_cast %67 : vector<1x8x8xf32> to vector<8x8xf32>
    %c0_17 = arith.constant 0 : index
    %c0_18 = arith.constant 0 : index
    %69 = vector.load %arg14[%c0_17, %c0_18] : memref<8x32xf32, #tpu.memory_space<vmem>>, vector<8x8xf32>
    tpu.vector_store %arg14[%c0_17, %c0_18], %68 {strides = array<i32>} : memref<8x32xf32, #tpu.memory_space<vmem>>, vector<8x8xf32>,
    %70 = vector.extract_strided_slice %66 {offsets = [1, 0, 0], sizes = [1, 8, 8], strides = [1, 1, 1]} : vector<4x8x8xf32> to vector<1x8x8xf32>
    %71 = vector.shape_cast %70 : vector<1x8x8xf32> to vector<8x8xf32>
    %c0_19 = arith.constant 0 : index
    %c8 = arith.constant 8 : index
    %72 = vector.load %arg14[%c0_19, %c8] : memref<8x32xf32, #tpu.memory_space<vmem>>, vector<8x8xf32>
    tpu.vector_store %arg14[%c0_19, %c8], %71 {strides = array<i32>} : memref<8x32xf32, #tpu.memory_space<vmem>>, vector<8x8xf32>,
    %73 = vector.extract_strided_slice %66 {offsets = [2, 0, 0], sizes = [1, 8, 8], strides = [1, 1, 1]} : vector<4x8x8xf32> to vector<1x8x8xf32>
    %74 = vector.shape_cast %73 : vector<1x8x8xf32> to vector<8x8xf32>
    %c0_20 = arith.constant 0 : index
    %c16 = arith.constant 16 : index
    %75 = vector.load %arg14[%c0_20, %c16] : memref<8x32xf32, #tpu.memory_space<vmem>>, vector<8x8xf32>
    tpu.vector_store %arg14[%c0_20, %c16], %74 {strides = array<i32>} : memref<8x32xf32, #tpu.memory_space<vmem>>, vector<8x8xf32>,
    %76 = vector.extract_strided_slice %66 {offsets = [3, 0, 0], sizes = [1, 8, 8], strides = [1, 1, 1]} : vector<4x8x8xf32> to vector<1x8x8xf32>
    %77 = vector.shape_cast %76 : vector<1x8x8xf32> to vector<8x8xf32>
    %c0_21 = arith.constant 0 : index
    %c24 = arith.constant 24 : index
    %78 = vector.load %arg14[%c0_21, %c24] : memref<8x32xf32, #tpu.memory_space<vmem>>, vector<8x8xf32>
    tpu.vector_store %arg14[%c0_21, %c24], %77 {strides = array<i32>} : memref<8x32xf32, #tpu.memory_space<vmem>>, vector<8x8xf32>,
    %c0_22 = arith.constant 0 : index
    %c0_23 = arith.constant 0 : index
    %79 = vector.load %arg14[%c0_22, %c0_23] : memref<8x32xf32, #tpu.memory_space<vmem>>, vector<8x32xf32>
    %c0_24 = arith.constant 0 : index
    %c0_25 = arith.constant 0 : index
    %80 = vector.load %arg5[%c0_24, %c0_25] : memref<32x32xf32, #tpu.memory_space<vmem>>, vector<32x32xf32>
    %cst_26 = arith.constant dense<0.000000e+00> : vector<8x32xf32>
    %81 = tpu.matmul %79, %80, %cst_26 {dimension_numbers = #tpu.dot_dimension_numbers<[1], [0], [0], [1], [0, 0, 1, 1], [], []>} : vector<8x32xf32>, vector<32x32xf32>, vector<8x32xf32> -> vector<8x32xf32>
    %c0_27 = arith.constant 0 : index
    %c0_28 = arith.constant 0 : index
    %82 = vector.load %arg6[%c0_27, %c0_28] : memref<1x32xf32, #tpu.memory_space<vmem>>, vector<1x32xf32>
    %83 = vector.broadcast %82 : vector<1x32xf32> to vector<8x32xf32>
    %84 = arith.addf %81, %83 : vector<8x32xf32>
    %85 = arith.addf %1, %84 : vector<8x32xf32>
    %c0_29 = arith.constant 0 : index
    %c0_30 = arith.constant 0 : index
    %86 = vector.load %arg7[%c0_29, %c0_30] : memref<1x32xf32, #tpu.memory_space<vmem>>, vector<1x32xf32>
    %c0_31 = arith.constant 0 : index
    %c0_32 = arith.constant 0 : index
    %87 = vector.load %arg8[%c0_31, %c0_32] : memref<1x32xf32, #tpu.memory_space<vmem>>, vector<1x32xf32>
    %cst_33 = arith.constant dense<0.000000e+00> : vector<8xf32>
    %88 = vector.multi_reduction <add>, %85, %cst_33 [1] : vector<8x32xf32> to vector<8xf32>
    %89 = vector.shape_cast %88 : vector<8xf32> to vector<8x1xf32>
    %cst_34 = arith.constant 3.200000e+01 : f32
    %90 = vector.broadcast %cst_34 : f32 to vector<8x1xf32>
    %91 = arith.divf %89, %90 : vector<8x1xf32>
    %92 = vector.broadcast %91 : vector<8x1xf32> to vector<8x32xf32>
    %93 = arith.subf %85, %92 : vector<8x32xf32>
    %94 = arith.mulf %93, %93 : vector<8x32xf32>
    %cst_35 = arith.constant dense<0.000000e+00> : vector<8xf32>
    %95 = vector.multi_reduction <add>, %94, %cst_35 [1] : vector<8x32xf32> to vector<8xf32>
    %96 = vector.shape_cast %95 : vector<8xf32> to vector<8x1xf32>
    %cst_36 = arith.constant 3.200000e+01 : f32
    %97 = vector.broadcast %cst_36 : f32 to vector<8x1xf32>
    %98 = arith.divf %96, %97 : vector<8x1xf32>
    %99 = vector.broadcast %91 : vector<8x1xf32> to vector<8x32xf32>
    %100 = arith.subf %85, %99 : vector<8x32xf32>
    %cst_37 = arith.constant 9.99999974E-6 : f32
    %101 = vector.broadcast %cst_37 : f32 to vector<8x1xf32>
    %102 = arith.addf %98, %101 : vector<8x1xf32>
    %103 = math.rsqrt %102 : vector<8x1xf32>
    %104 = vector.broadcast %103 : vector<8x1xf32> to vector<8x32xf32>
    %105 = arith.mulf %100, %104 : vector<8x32xf32>
    %106 = vector.broadcast %86 : vector<1x32xf32> to vector<8x32xf32>
    %107 = arith.mulf %105, %106 : vector<8x32xf32>
    %108 = vector.broadcast %87 : vector<1x32xf32> to vector<8x32xf32>
    %109 = arith.addf %107, %108 : vector<8x32xf32>
    %c0_38 = arith.constant 0 : index
    %c0_39 = arith.constant 0 : index
    %110 = vector.load %arg9[%c0_38, %c0_39] : memref<32x128xf32, #tpu.memory_space<vmem>>, vector<32x128xf32>
    %cst_40 = arith.constant dense<0.000000e+00> : vector<8x128xf32>
    %111 = tpu.matmul %109, %110, %cst_40 {dimension_numbers = #tpu.dot_dimension_numbers<[1], [0], [0], [1], [0, 0, 1, 1], [], []>} : vector<8x32xf32>, vector<32x128xf32>, vector<8x128xf32> -> vector<8x128xf32>
    %c0_41 = arith.constant 0 : index
    %c0_42 = arith.constant 0 : index
    %112 = vector.load %arg10[%c0_41, %c0_42] : memref<1x128xf32, #tpu.memory_space<vmem>>, vector<1x128xf32>
    %113 = vector.broadcast %112 : vector<1x128xf32> to vector<8x128xf32>
    %114 = arith.addf %111, %113 : vector<8x128xf32>
    %cst_43 = arith.constant 5.000000e-01 : f32
    %115 = vector.broadcast %cst_43 : f32 to vector<8x128xf32>
    %116 = arith.mulf %115, %114 : vector<8x128xf32>
    %cst_44 = arith.constant 0.707106769 : f32
    %117 = vector.broadcast %cst_44 : f32 to vector<8x128xf32>
    %118 = arith.mulf %114, %117 : vector<8x128xf32>
    %119 = math.erf %118 : vector<8x128xf32>
    %cst_45 = arith.constant 1.000000e+00 : f32
    %120 = vector.broadcast %cst_45 : f32 to vector<8x128xf32>
    %121 = arith.addf %120, %119 : vector<8x128xf32>
    %122 = arith.mulf %116, %121 : vector<8x128xf32>
    %c0_46 = arith.constant 0 : index
    %c0_47 = arith.constant 0 : index
    %123 = vector.load %arg11[%c0_46, %c0_47] : memref<128x32xf32, #tpu.memory_space<vmem>>, vector<128x32xf32>
    %cst_48 = arith.constant dense<0.000000e+00> : vector<8x32xf32>
    %124 = tpu.matmul %122, %123, %cst_48 {dimension_numbers = #tpu.dot_dimension_numbers<[1], [0], [0], [1], [0, 0, 1, 1], [], []>} : vector<8x128xf32>, vector<128x32xf32>, vector<8x32xf32> -> vector<8x32xf32>
    %c0_49 = arith.constant 0 : index
    %c0_50 = arith.constant 0 : index
    %125 = vector.load %arg12[%c0_49, %c0_50] : memref<1x32xf32, #tpu.memory_space<vmem>>, vector<1x32xf32>
    %126 = vector.broadcast %125 : vector<1x32xf32> to vector<8x32xf32>
    %127 = arith.addf %124, %126 : vector<8x32xf32>
    %128 = arith.addf %85, %127 : vector<8x32xf32>
    %c0_51 = arith.constant 0 : index
    %c0_52 = arith.constant 0 : index
    %c0_53 = arith.constant 0 : index
    %129 = vector.load %arg13[%c0_51, %c0_52, %c0_53] : memref<1x8x32xf32, #tpu.memory_space<vmem>>, vector<1x8x32xf32>
    %130 = vector.shape_cast %129 : vector<1x8x32xf32> to vector<8x32xf32>
    %131 = vector.shape_cast %128 : vector<8x32xf32> to vector<1x8x32xf32>
    tpu.vector_store %arg13[%c0_51, %c0_52, %c0_53], %131 {strides = array<i32>} : memref<1x8x32xf32, #tpu.memory_space<vmem>>, vector<1x8x32xf32>,
    return
  }
  func.func @transform_0(%arg0: i32) -> (i32, i32, i32) {
    %c0_i32 = arith.constant 0 : i32
    %c0_i32_0 = arith.constant 0 : i32
    %c0_i32_1 = arith.constant 0 : i32
    return %arg0, %c0_i32, %c0_i32_0 : i32, i32, i32
  }
  func.func @transform_1(%arg0: i32) -> (i32, i32) {
    %c0_i32 = arith.constant 0 : i32
    %c0_i32_0 = arith.constant 0 : i32
    %c0_i32_1 = arith.constant 0 : i32
    return %c0_i32, %c0_i32_0 : i32, i32
  }
  func.func @transform_2(%arg0: i32) -> (i32, i32) {
    %c0_i32 = arith.constant 0 : i32
    %c0_i32_0 = arith.constant 0 : i32
    %c0_i32_1 = arith.constant 0 : i32
    return %c0_i32, %c0_i32_0 : i32, i32
  }
  func.func @transform_3(%arg0: i32) -> (i32, i32) {
    %c0_i32 = arith.constant 0 : i32
    %c0_i32_0 = arith.constant 0 : i32
    %c0_i32_1 = arith.constant 0 : i32
    return %c0_i32, %c0_i32_0 : i32, i32
  }
  func.func @transform_4(%arg0: i32) -> (i32, i32) {
    %c0_i32 = arith.constant 0 : i32
    %c0_i32_0 = arith.constant 0 : i32
    %c0_i32_1 = arith.constant 0 : i32
    return %c0_i32, %c0_i32_0 : i32, i32
  }
  func.func @transform_5(%arg0: i32) -> (i32, i32) {
    %c0_i32 = arith.constant 0 : i32
    %c0_i32_0 = arith.constant 0 : i32
    %c0_i32_1 = arith.constant 0 : i32
    return %c0_i32, %c0_i32_0 : i32, i32
  }
  func.func @transform_6(%arg0: i32) -> (i32, i32) {
    %c0_i32 = arith.constant 0 : i32
    %c0_i32_0 = arith.constant 0 : i32
    %c0_i32_1 = arith.constant 0 : i32
    return %c0_i32, %c0_i32_0 : i32, i32
  }
  func.func @transform_7(%arg0: i32) -> (i32, i32) {
    %c0_i32 = arith.constant 0 : i32
    %c0_i32_0 = arith.constant 0 : i32
    %c0_i32_1 = arith.constant 0 : i32
    return %c0_i32, %c0_i32_0 : i32, i32
  }
  func.func @transform_8(%arg0: i32) -> (i32, i32) {
    %c0_i32 = arith.constant 0 : i32
    %c0_i32_0 = arith.constant 0 : i32
    %c0_i32_1 = arith.constant 0 : i32
    return %c0_i32, %c0_i32_0 : i32, i32
  }
  func.func @transform_9(%arg0: i32) -> (i32, i32) {
    %c0_i32 = arith.constant 0 : i32
    %c0_i32_0 = arith.constant 0 : i32
    %c0_i32_1 = arith.constant 0 : i32
    return %c0_i32, %c0_i32_0 : i32, i32
  }
  func.func @transform_10(%arg0: i32) -> (i32, i32) {
    %c0_i32 = arith.constant 0 : i32
    %c0_i32_0 = arith.constant 0 : i32
    %c0_i32_1 = arith.constant 0 : i32
    return %c0_i32, %c0_i32_0 : i32, i32
  }
  func.func @transform_11(%arg0: i32) -> (i32, i32) {
    %c0_i32 = arith.constant 0 : i32
    %c0_i32_0 = arith.constant 0 : i32
    %c0_i32_1 = arith.constant 0 : i32
    return %c0_i32, %c0_i32_0 : i32, i32
  }
  func.func @transform_12(%arg0: i32) -> (i32, i32, i32) {
    %c0_i32 = arith.constant 0 : i32
    %c0_i32_0 = arith.constant 0 : i32
    %c0_i32_1 = arith.constant 0 : i32
    return %arg0, %c0_i32, %c0_i32_0 : i32, i32, i32
  }
}

</mosaic_0001>

<llo_original>
// kernel: tpu_custom_call.1
$region0: #{tpu_custom_call.1}
  #allocation0 [shape = 'u32[]', space=smem, size = 0x4, offset = 0x4, fixed_abs, tag = 'smem constant byte address 0x4 - core index']
  #allocation1 [shape = 'u32[72,128]{1,0:T(1,128)}', space=vmem, size = 0x9000, scoped, tag = 'internal scratch']
  #allocation2 [shape = 'f32[8,32]{1,0:T(8,128)}', space=vmem, size = 0x1000, scoped, tag = 'scratch operand']
  %s0 = inlined_call_operand.vmem [shape: f32[2,8,32], index: 0, kind: input, shape index: {}]
  %s1 = inlined_call_operand.vmem [shape: f32[1,32], index: 1, kind: input, shape index: {}]
  %s2 = inlined_call_operand.vmem [shape: f32[1,32], index: 2, kind: input, shape index: {}]
  %s3 = inlined_call_operand.vmem [shape: f32[32,96], index: 3, kind: input, shape index: {}]
  %s4 = inlined_call_operand.vmem [shape: f32[32,32], index: 4, kind: input, shape index: {}]
  %s5 = inlined_call_operand.vmem [shape: f32[1,32], index: 5, kind: input, shape index: {}]
  %s6 = inlined_call_operand.vmem [shape: f32[1,32], index: 6, kind: input, shape index: {}]
  %s7 = inlined_call_operand.vmem [shape: f32[1,32], index: 7, kind: input, shape index: {}]
  %s8 = inlined_call_operand.vmem [shape: f32[32,128], index: 8, kind: input, shape index: {}]
  %s9 = inlined_call_operand.vmem [shape: f32[1,128], index: 9, kind: input, shape index: {}]
  %s10 = inlined_call_operand.vmem [shape: f32[128,32], index: 10, kind: input, shape index: {}]
  %s11 = inlined_call_operand.vmem [shape: f32[1,32], index: 11, kind: input, shape index: {}]
  %s12 = inlined_call_operand.hbm [shape: f32[2,8,32], index: 12, kind: output, shape index: {}]
  %s13 = sld [smem:[#allocation0]]
  $region81: #{tpu_custom_call.1} parent=0
    _
  %s15 = ssub.s32 1, %s13
  %s16 = scalar_select 0, %s15, %s13
  $region1: #{tpu_custom_call.1} parent=0
    #allocation3 [shape = 'u8[8192]{0}', space=vmem, size = 0x2000, scoped, tag = 'output window, operand 0']
    #allocation4 [shape = 's32[2]{0}', space=sflag, size = 0x8, scoped, tag = 'scoped memory for tpu_custom_call.1']
    %17 = vsyncpa [#allocation4], 0
    %s18 = scalar_lea.sflag [#allocation4], 1
    %19 = vsyncpa %s18, 0
    loop: start=0, step=1, limit=4
    $region2: #{tpu_custom_call.1} parent=1 // loop_pre_header
      _
    $region3: #{tpu_custom_call.1} parent=1 // loop_header
      %s21 = sphi 0, %s25
      %p22 = scmp.ge.s32.totalorder %s21, 4
      %s31 = sphi 0, %s33
      %s34 = sphi 0, %s31
      %s35 = sphi 0, %s34
      %s51 = sphi 0, %s35
      %s55 = sphi 0, %s55
      %s57 = sphi 0, %s55
      %s58 = sphi 0, %s57
      %s72 = sphi 0, %s58
      %s76 = sphi 0, %s76
      %s78 = sphi 0, %s76
      %s79 = sphi 0, %s78
      %s93 = sphi 0, %s79
      %s97 = sphi 0, %s97
      %s99 = sphi 0, %s97
      %s100 = sphi 0, %s99
      %s114 = sphi 0, %s100
      %s118 = sphi 0, %s118
      %s120 = sphi 0, %s118
      %s121 = sphi 0, %s120
      %s135 = sphi 0, %s121
      %s139 = sphi 0, %s139
      %s141 = sphi 0, %s139
      %s142 = sphi 0, %s141
      %s156 = sphi 0, %s142
      %s160 = sphi 0, %s160
      %s162 = sphi 0, %s160
      %s163 = sphi 0, %s162
      %s177 = sphi 0, %s163
      %s181 = sphi 0, %s181
      %s183 = sphi 0, %s181
      %s184 = sphi 0, %s183
      %s198 = sphi 0, %s184
      %s202 = sphi 0, %s202
      %s204 = sphi 0, %s202
      %s205 = sphi 0, %s204
      %s219 = sphi 0, %s205
      %s223 = sphi 0, %s223
      %s225 = sphi 0, %s223
      %s226 = sphi 0, %s225
      %s240 = sphi 0, %s226
      %s244 = sphi 0, %s244
      %s246 = sphi 0, %s244
      %s247 = sphi 0, %s246
      %s261 = sphi 0, %s247
      %s265 = sphi 0, %s265
      %s267 = sphi 0, %s265
      %s268 = sphi 0, %s267
      %s282 = sphi 0, %s268
      %s288 = sphi 0, %s290
      %s291 = sphi 0, %s288
      %s292 = sphi 0, %s291
      %s308 = sphi 0, %s292
    $region4: #{tpu_custom_call.1} parent=1 // loop_header_branch
      %24 = sbr.rel (%p22) target = $region8
    $region5: #{tpu_custom_call.1} parent=1 // loop_body
      %s26 = ssub.s32 %s21, 1
      %s27 = ssub.s32 %s21, 2
      %s28 = sadd.s32 %s21, 1
      %s29 = ssub.s32 %s21, %s28
      %p30 = scmp.eq.s32.totalorder %s29, 0
      %s32 = sadd.s32 %s31, 1
      %s33 = scalar_select %p30, %s31, %s32
      %p36 = pneg %p30
      %p37 = scmp.eq.s32.totalorder %s21, 1
      %p38 = por %p36, %p37
      %p39 = scmp.ne.s32.totalorder %s31, %s34
      %p40 = scmp.eq.s32.totalorder %s21, 0
      %p41 = por %p39, %p40
      %p42 = scmp.ne.s32.totalorder %s31, %s34
      %p43 = scmp.eq.s32.totalorder %s26, 1
      %p44 = por %p42, %p43
      %p45 = scmp.ne.s32.totalorder %s34, %s35
      %p46 = scmp.eq.s32.totalorder %s26, 0
      %p47 = por %p45, %p46
      %p48 = scmp.ne.s32.totalorder %s34, %s35
      %p49 = scmp.eq.s32.totalorder %s27, 1
      %p50 = por %p48, %p49
      %p52 = scmp.ne.s32.totalorder %s35, %s51
      %p53 = scmp.eq.s32.totalorder %s27, 0
      %p54 = por %p52, %p53
      %s56 = sadd.s32 %s55, 1
      %p59 = scmp.eq.s32.totalorder %s21, 1
      %p60 = scmp.ne.s32.totalorder %s55, %s57
      %p61 = scmp.eq.s32.totalorder %s21, 0
      %p62 = por %p60, %p61
      %p63 = scmp.ne.s32.totalorder %s55, %s57
      %p64 = scmp.eq.s32.totalorder %s26, 1
      %p65 = por %p63, %p64
      %p66 = scmp.ne.s32.totalorder %s57, %s58
      %p67 = scmp.eq.s32.totalorder %s26, 0
      %p68 = por %p66, %p67
      %p69 = scmp.ne.s32.totalorder %s57, %s58
      %p70 = scmp.eq.s32.totalorder %s27, 1
      %p71 = por %p69, %p70
      %p73 = scmp.ne.s32.totalorder %s58, %s72
      %p74 = scmp.eq.s32.totalorder %s27, 0
      %p75 = por %p73, %p74
      %s77 = sadd.s32 %s76, 1
      %p80 = scmp.eq.s32.totalorder %s21, 1
      %p81 = scmp.ne.s32.totalorder %s76, %s78
      %p82 = scmp.eq.s32.totalorder %s21, 0
      %p83 = por %p81, %p82
      %p84 = scmp.ne.s32.totalorder %s76, %s78
      %p85 = scmp.eq.s32.totalorder %s26, 1
      %p86 = por %p84, %p85
      %p87 = scmp.ne.s32.totalorder %s78, %s79
      %p88 = scmp.eq.s32.totalorder %s26, 0
      %p89 = por %p87, %p88
      %p90 = scmp.ne.s32.totalorder %s78, %s79
      %p91 = scmp.eq.s32.totalorder %s27, 1
      %p92 = por %p90, %p91
      %p94 = scmp.ne.s32.totalorder %s79, %s93
      %p95 = scmp.eq.s32.totalorder %s27, 0
      %p96 = por %p94, %p95
      %s98 = sadd.s32 %s97, 1
      %p101 = scmp.eq.s32.totalorder %s21, 1
      %p102 = scmp.ne.s32.totalorder %s97, %s99
      %p103 = scmp.eq.s32.totalorder %s21, 0
      %p104 = por %p102, %p103
      %p105 = scmp.ne.s32.totalorder %s97, %s99
      %p106 = scmp.eq.s32.totalorder %s26, 1
      %p107 = por %p105, %p106
      %p108 = scmp.ne.s32.totalorder %s99, %s100
      %p109 = scmp.eq.s32.totalorder %s26, 0
      %p110 = por %p108, %p109
      %p111 = scmp.ne.s32.totalorder %s99, %s100
      %p112 = scmp.eq.s32.totalorder %s27, 1
      %p113 = por %p111, %p112
      %p115 = scmp.ne.s32.totalorder %s100, %s114
      %p116 = scmp.eq.s32.totalorder %s27, 0
      %p117 = por %p115, %p116
      %s119 = sadd.s32 %s118, 1
      %p122 = scmp.eq.s32.totalorder %s21, 1
      %p123 = scmp.ne.s32.totalorder %s118, %s120
      %p124 = scmp.eq.s32.totalorder %s21, 0
      %p125 = por %p123, %p124
      %p126 = scmp.ne.s32.totalorder %s118, %s120
      %p127 = scmp.eq.s32.totalorder %s26, 1
      %p128 = por %p126, %p127
      %p129 = scmp.ne.s32.totalorder %s120, %s121
      %p130 = scmp.eq.s32.totalorder %s26, 0
      %p131 = por %p129, %p130
      %p132 = scmp.ne.s32.totalorder %s120, %s121
      %p133 = scmp.eq.s32.totalorder %s27, 1
      %p134 = por %p132, %p133
      %p136 = scmp.ne.s32.totalorder %s121, %s135
      %p137 = scmp.eq.s32.totalorder %s27, 0
      %p138 = por %p136, %p137
      %s140 = sadd.s32 %s139, 1
      %p143 = scmp.eq.s32.totalorder %s21, 1
      %p144 = scmp.ne.s32.totalorder %s139, %s141
      %p145 = scmp.eq.s32.totalorder %s21, 0
      %p146 = por %p144, %p145
      %p147 = scmp.ne.s32.totalorder %s139, %s141
      %p148 = scmp.eq.s32.totalorder %s26, 1
      %p149 = por %p147, %p148
      %p150 = scmp.ne.s32.totalorder %s141, %s142
      %p151 = scmp.eq.s32.totalorder %s26, 0
      %p152 = por %p150, %p151
      %p153 = scmp.ne.s32.totalorder %s141, %s142
      %p154 = scmp.eq.s32.totalorder %s27, 1
      %p155 = por %p153, %p154
      %p157 = scmp.ne.s32.totalorder %s142, %s156
      %p158 = scmp.eq.s32.totalorder %s27, 0
      %p159 = por %p157, %p158
      %s161 = sadd.s32 %s160, 1
      %p164 = scmp.eq.s32.totalorder %s21, 1
      %p165 = scmp.ne.s32.totalorder %s160, %s162
      %p166 = scmp.eq.s32.totalorder %s21, 0
      %p167 = por %p165, %p166
      %p168 = scmp.ne.s32.totalorder %s160, %s162
      %p169 = scmp.eq.s32.totalorder %s26, 1
      %p170 = por %p168, %p169
      %p171 = scmp.ne.s32.totalorder %s162, %s163
      %p172 = scmp.eq.s32.totalorder %s26, 0
      %p173 = por %p171, %p172
      %p174 = scmp.ne.s32.totalorder %s162, %s163
      %p175 = scmp.eq.s32.totalorder %s27, 1
      %p176 = por %p174, %p175
      %p178 = scmp.ne.s32.totalorder %s163, %s177
      %p179 = scmp.eq.s32.totalorder %s27, 0
      %p180 = por %p178, %p179
      %s182 = sadd.s32 %s181, 1
      %p185 = scmp.eq.s32.totalorder %s21, 1
      %p186 = scmp.ne.s32.totalorder %s181, %s183
      %p187 = scmp.eq.s32.totalorder %s21, 0
      %p188 = por %p186, %p187
      %p189 = scmp.ne.s32.totalorder %s181, %s183
      %p190 = scmp.eq.s32.totalorder %s26, 1
      %p191 = por %p189, %p190
      %p192 = scmp.ne.s32.totalorder %s183, %s184
      %p193 = scmp.eq.s32.totalorder %s26, 0
      %p194 = por %p192, %p193
      %p195 = scmp.ne.s32.totalorder %s183, %s184
      %p196 = scmp.eq.s32.totalorder %s27, 1
      %p197 = por %p195, %p196
      %p199 = scmp.ne.s32.totalorder %s184, %s198
      %p200 = scmp.eq.s32.totalorder %s27, 0
      %p201 = por %p199, %p200
      %s203 = sadd.s32 %s202, 1
      %p206 = scmp.eq.s32.totalorder %s21, 1
      %p207 = scmp.ne.s32.totalorder %s202, %s204
      %p208 = scmp.eq.s32.totalorder %s21, 0
      %p209 = por %p207, %p208
      %p210 = scmp.ne.s32.totalorder %s202, %s204
      %p211 = scmp.eq.s32.totalorder %s26, 1
      %p212 = por %p210, %p211
      %p213 = scmp.ne.s32.totalorder %s204, %s205
      %p214 = scmp.eq.s32.totalorder %s26, 0
      %p215 = por %p213, %p214
      %p216 = scmp.ne.s32.totalorder %s204, %s205
      %p217 = scmp.eq.s32.totalorder %s27, 1
      %p218 = por %p216, %p217
      %p220 = scmp.ne.s32.totalorder %s205, %s219
      %p221 = scmp.eq.s32.totalorder %s27, 0
      %p222 = por %p220, %p221
      %s224 = sadd.s32 %s223, 1
      %p227 = scmp.eq.s32.totalorder %s21, 1
      %p228 = scmp.ne.s32.totalorder %s223, %s225
      %p229 = scmp.eq.s32.totalorder %s21, 0
      %p230 = por %p228, %p229
      %p231 = scmp.ne.s32.totalorder %s223, %s225
      %p232 = scmp.eq.s32.totalorder %s26, 1
      %p233 = por %p231, %p232
      %p234 = scmp.ne.s32.totalorder %s225, %s226
      %p235 = scmp.eq.s32.totalorder %s26, 0
      %p236 = por %p234, %p235
      %p237 = scmp.ne.s32.totalorder %s225, %s226
      %p238 = scmp.eq.s32.totalorder %s27, 1
      %p239 = por %p237, %p238
      %p241 = scmp.ne.s32.totalorder %s226, %s240
      %p242 = scmp.eq.s32.totalorder %s27, 0
      %p243 = por %p241, %p242
      %s245 = sadd.s32 %s244, 1
      %p248 = scmp.eq.s32.totalorder %s21, 1
      %p249 = scmp.ne.s32.totalorder %s244, %s246
      %p250 = scmp.eq.s32.totalorder %s21, 0
      %p251 = por %p249, %p250
      %p252 = scmp.ne.s32.totalorder %s244, %s246
      %p253 = scmp.eq.s32.totalorder %s26, 1
      %p254 = por %p252, %p253
      %p255 = scmp.ne.s32.totalorder %s246, %s247
      %p256 = scmp.eq.s32.totalorder %s26, 0
      %p257 = por %p255, %p256
      %p258 = scmp.ne.s32.totalorder %s246, %s247
      %p259 = scmp.eq.s32.totalorder %s27, 1
      %p260 = por %p258, %p259
      %p262 = scmp.ne.s32.totalorder %s247, %s261
      %p263 = scmp.eq.s32.totalorder %s27, 0
      %p264 = por %p262, %p263
      %s266 = sadd.s32 %s265, 1
      %p269 = scmp.eq.s32.totalorder %s21, 1
      %p270 = scmp.ne.s32.totalorder %s265, %s267
      %p271 = scmp.eq.s32.totalorder %s21, 0
      %p272 = por %p270, %p271
      %p273 = scmp.ne.s32.totalorder %s265, %s267
      %p274 = scmp.eq.s32.totalorder %s26, 1
      %p275 = por %p273, %p274
      %p276 = scmp.ne.s32.totalorder %s267, %s268
      %p277 = scmp.eq.s32.totalorder %s26, 0
      %p278 = por %p276, %p277
      %p279 = scmp.ne.s32.totalorder %s267, %s268
      %p280 = scmp.eq.s32.totalorder %s27, 1
      %p281 = por %p279, %p280
      %p283 = scmp.ne.s32.totalorder %s268, %s282
      %p284 = scmp.eq.s32.totalorder %s27, 0
      %p285 = por %p283, %p284
      %s286 = ssub.s32 %s21, %s28
      %p287 = scmp.eq.s32.totalorder %s286, 0
      %s289 = sadd.s32 %s288, 1
      %s290 = scalar_select %p287, %s288, %s289
      %p293 = pneg %p287
      %p294 = scmp.eq.s32.totalorder %s21, 1
      %p295 = por %p293, %p294
      %p296 = scmp.ne.s32.totalorder %s288, %s291
      %p297 = scmp.eq.s32.totalorder %s21, 0
      %p298 = por %p296, %p297
      %p299 = scmp.ne.s32.totalorder %s288, %s291
      %p300 = scmp.eq.s32.totalorder %s26, 1
      %p301 = por %p299, %p300
      %p302 = scmp.ne.s32.totalorder %s291, %s292
      %p303 = scmp.eq.s32.totalorder %s26, 0
      %p304 = por %p302, %p303
      %p305 = scmp.ne.s32.totalorder %s291, %s292
      %p306 = scmp.eq.s32.totalorder %s27, 1
      %p307 = por %p305, %p306
      %p309 = scmp.ne.s32.totalorder %s292, %s308
      %p310 = scmp.eq.s32.totalorder %s27, 0
      %p311 = por %p309, %p310
      %p312 = scmp.le.s32.totalorder 1, %s21
      %p313 = scmp.lt.s32.totalorder %s21, 3
      %p314 = pnand %p312, %p313
      %p315 = pneg %p314
      // Predicated region
      $region9: #{tpu_custom_call.1} parent=5 // pred_check
        _
      $region10: #{tpu_custom_call.1} parent=5 // pred_check_branch
        %317 = sbr.rel (%p314) target = $region12
      $region11: #{tpu_custom_call.1} parent=5 // pred_region
        %s318 = ssub.s32 %s21, 1
        // Predicated region
        $region13: #{tpu_custom_call.1} parent=11 // pred_check
          %p319 = pneg %p68
        $region14: #{tpu_custom_call.1} parent=11 // pred_check_branch
          %321 = sbr.rel (%p319) target = $region16
        $region15: #{tpu_custom_call.1} parent=11 // pred_region
          _
        $region16: #{tpu_custom_call.1} parent=11 // pred_fallthru
          _
        // Predicated region
        $region17: #{tpu_custom_call.1} parent=11 // pred_check
          %p322 = pneg %p89
        $region18: #{tpu_custom_call.1} parent=11 // pred_check_branch
          %324 = sbr.rel (%p322) target = $region20
        $region19: #{tpu_custom_call.1} parent=11 // pred_region
          _
        $region20: #{tpu_custom_call.1} parent=11 // pred_fallthru
          _
        // Predicated region
        $region21: #{tpu_custom_call.1} parent=11 // pred_check
          %p325 = pneg %p110
        $region22: #{tpu_custom_call.1} parent=11 // pred_check_branch
          %327 = sbr.rel (%p325) target = $region24
        $region23: #{tpu_custom_call.1} parent=11 // pred_region
          _
        $region24: #{tpu_custom_call.1} parent=11 // pred_fallthru
          _
        // Predicated region
        $region25: #{tpu_custom_call.1} parent=11 // pred_check
          %p328 = pneg %p131
        $region26: #{tpu_custom_call.1} parent=11 // pred_check_branch
          %330 = sbr.rel (%p328) target = $region28
        $region27: #{tpu_custom_call.1} parent=11 // pred_region
          _
        $region28: #{tpu_custom_call.1} parent=11 // pred_fallthru
          _
        // Predicated region
        $region29: #{tpu_custom_call.1} parent=11 // pred_check
          %p331 = pneg %p152
        $region30: #{tpu_custom_call.1} parent=11 // pred_check_branch
          %333 = sbr.rel (%p331) target = $region32
        $region31: #{tpu_custom_call.1} parent=11 // pred_region
          _
        $region32: #{tpu_custom_call.1} parent=11 // pred_fallthru
          _
        // Predicated region
        $region33: #{tpu_custom_call.1} parent=11 // pred_check
          %p334 = pneg %p173
        $region34: #{tpu_custom_call.1} parent=11 // pred_check_branch
          %336 = sbr.rel (%p334) target = $region36
        $region35: #{tpu_custom_call.1} parent=11 // pred_region
          _
        $region36: #{tpu_custom_call.1} parent=11 // pred_fallthru
          _
        // Predicated region
        $region37: #{tpu_custom_call.1} parent=11 // pred_check
          %p337 = pneg %p194
        $region38: #{tpu_custom_call.1} parent=11 // pred_check_branch
          %339 = sbr.rel (%p337) target = $region40
        $region39: #{tpu_custom_call.1} parent=11 // pred_region
          _
        $region40: #{tpu_custom_call.1} parent=11 // pred_fallthru
          _
        // Predicated region
        $region41: #{tpu_custom_call.1} parent=11 // pred_check
          %p340 = pneg %p215
        $region42: #{tpu_custom_call.1} parent=11 // pred_check_branch
          %342 = sbr.rel (%p340) target = $region44
        $region43: #{tpu_custom_call.1} parent=11 // pred_region
          _
        $region44: #{tpu_custom_call.1} parent=11 // pred_fallthru
          _
        // Predicated region
        $region45: #{tpu_custom_call.1} parent=11 // pred_check
          %p343 = pneg %p236
        $region46: #{tpu_custom_call.1} parent=11 // pred_check_branch
          %345 = sbr.rel (%p343) target = $region48
        $region47: #{tpu_custom_call.1} parent=11 // pred_region
          _
        $region48: #{tpu_custom_call.1} parent=11 // pred_fallthru
          _
        // Predicated region
        $region49: #{tpu_custom_call.1} parent=11 // pred_check
          %p346 = pneg %p257
        $region50: #{tpu_custom_call.1} parent=11 // pred_check_branch
          %348 = sbr.rel (%p346) target = $region52
        $region51: #{tpu_custom_call.1} parent=11 // pred_region
          _
        $region52: #{tpu_custom_call.1} parent=11 // pred_fallthru
          _
        // Predicated region
        $region53: #{tpu_custom_call.1} parent=11 // pred_check
          %p349 = pneg %p278
        $region54: #{tpu_custom_call.1} parent=11 // pred_check_branch
          %351 = sbr.rel (%p349) target = $region56
        $region55: #{tpu_custom_call.1} parent=11 // pred_region
          _
        $region56: #{tpu_custom_call.1} parent=11 // pred_fallthru
          _
      $region12: #{tpu_custom_call.1} parent=5 // pred_fallthru
        _
      %p352 = scmp.lt.s32.totalorder %s21, 2
      // Predicated region
      $region57: #{tpu_custom_call.1} parent=5 // pred_check
        %p353 = pneg %p352
      $region58: #{tpu_custom_call.1} parent=5 // pred_check_branch
        %355 = sbr.rel (%p353) target = $region60
      $region59: #{tpu_custom_call.1} parent=5 // pred_region
        // Predicated region
        $region61: #{tpu_custom_call.1} parent=59 // pred_check
          %p356 = pneg %p41
        $region62: #{tpu_custom_call.1} parent=59 // pred_check_branch
          %358 = sbr.rel (%p356) target = $region64
        $region63: #{tpu_custom_call.1} parent=59 // pred_region
          %p359 = scmp.lt.s32.totalorder %s21, 1
          %s360 = scalar_select %p359, %s21, 1
          %s361 = smul.addr %s360, 8
          %s362 = scalar_lea.vmem %s0, %s361
        $region64: #{tpu_custom_call.1} parent=59 // pred_fallthru
          _
      $region60: #{tpu_custom_call.1} parent=5 // pred_fallthru
        _
      %p363 = scmp.le.s32.totalorder 1, %s21
      %p364 = scmp.lt.s32.totalorder %s21, 3
      %p365 = pnand %p363, %p364
      %p366 = pneg %p365
      // Predicated region
      $region65: #{tpu_custom_call.1} parent=5 // pred_check
        _
      $region66: #{tpu_custom_call.1} parent=5 // pred_check_branch
        %368 = sbr.rel (%p365) target = $region68
      $region67: #{tpu_custom_call.1} parent=5 // pred_region
        %s369 = ssub.s32 %s21, 1
        %p370 = scmp.lt.s32.totalorder %s26, 1
        %s371 = scalar_select %p370, %s26, 1
        %s372 = smul.addr %s371, 8
        %s373 = scalar_lea.vmem %s0, %s372
        %p374 = pneg %p47
        %p375 = pneg %p44
        %p376 = pneg %p68
        %p377 = pneg %p65
        %p378 = pneg %p89
        %p379 = pneg %p86
        %p380 = pneg %p110
        %p381 = pneg %p107
        %p382 = pneg %p131
        %p383 = pneg %p128
        %p384 = pneg %p152
        %p385 = pneg %p149
        %p386 = pneg %p173
        %p387 = pneg %p170
        %p388 = pneg %p194
        %p389 = pneg %p191
        %p390 = pneg %p215
        %p391 = pneg %p212
        %p392 = pneg %p236
        %p393 = pneg %p233
        %p394 = pneg %p257
        %p395 = pneg %p254
        %p396 = pneg %p278
        %p397 = pneg %p275
        %p398 = pneg %p304
        %p399 = pneg %p301
        %s400 = sand.u32 %s291, 1
        %s401 = scalar_lea.sflag [#allocation4], %s400
        %s402 = sand.u32 %s291, 1
        %s403 = smul.addr %s402, 8
        %s404 = scalar_lea.vmem [#allocation3], %s403
        %p405 = scmp.lt.s32.totalorder %s26, 1
        %s406 = scalar_select %p405, %s26, 1
        %s407 = smul.addr %s406, 8
        %s408 = scalar_lea.vmem %s0, %s407
        %v409 = vld [vmem:[%s408] sm:$0xff]
        %v410 = vld [vmem:[%s1] sm:$0x1]
        %v411 = vld [vmem:[%s2] sm:$0x1]
        %vm412 = vcmask 261120
        %v413 = vsel %vm412, %v409, 0.0
        %414 = vadd.xlane.f32.xlu0 %v413
        %v415 = vpop.xlane.xlu0 %414
        %v416 = vrcp.pop 32.0
        %v417 = vmul.f32 32.0, %v416
        %v418 = vsub.f32 1.0, %v417
        %v419 = vmul.f32 %v416, %v418
        %v420 = vadd.f32 %v416, %v419
        %vm421 = vweird.f32 %v416
        %v422 = vsel %vm421, %v416, %v420
        %v423 = vmul.f32 %v415, %v422
        %v424 = vsub.f32 %v409, %v423
        %v425 = vmul.f32 %v424, %v424
        %v426 = vsel %vm412, %v425, 0.0
        %427 = vadd.xlane.f32.xlu0 %v426
        %v428 = vpop.xlane.xlu0 %427
        %v429 = vmul.f32 %v428, %v422
        %v430 = vadd.f32 %v429, 1e-05
        %v431 = vrsqrt.pop %v430
        %v432 = vmul.f32 %v431, %v430
        %v433 = vmul.f32 %v432, %v431
        %v434 = vmul.f32 0.5, %v433
        %v435 = vsub.f32 1.5, %v434
        %v436 = vmul.f32 %v431, %v435
        %vm437 = vweird.f32 %v430
        %vm438 = vweird.f32 %v431
        %vm439 = vmor %vm437, %vm438
        %v440 = vsel %vm439, %v431, %v436
        %v441 = vmul.f32 %v424, %v440
        %v443 = vperm.slane %v410, 0
        %v445 = vmul.f32 %v441, %v443
        %v447 = vperm.slane %v411, 0
        %v449 = vadd.f32 %v445, %v447
        %v450 = vld [vmem:[%s3] sm:$0xff]
        %v451 = vld [vmem:[%s3 + $0x8] sm:$0xff]
        %v452 = vld [vmem:[%s3 + $0x10] sm:$0xff]
        %v453 = vld [vmem:[%s3 + $0x18] sm:$0xff]
        %v455 = vsel %vm412, %v449, 0
        %457 = vmatpush.msra.mxu0 0.0
        %458 = vmatpush.msra.mxu0 0.0
        %459 = vmatpush.msra.mxu0 0.0
        %460 = vmatpush.msra.mxu0 0.0
        %461 = vmatpush.msra.mxu0 0.0
        %462 = vmatpush.msra.mxu0 0.0
        %463 = vmatpush.msra.mxu0 0.0
        %464 = vmatpush.msra.mxu0 0.0
        %465 = vmatpush.msra.mxu0 0.0
        %466 = vmatpush.msra.mxu0 0.0
        %467 = vmatpush.msra.mxu0 0.0
        %468 = vmatpush.msra.mxu0 0.0
        %469 = vmatpush.msra.mxu0 %v453
        %470 = vmatpush.msra.mxu0 %v452
        %471 = vmatpush.msra.mxu0 %v451
        %472 = vmatpush.msra.mxu0 %v450
        %473 = vmatmul.f32.gmra.mxu0 %v455
        %v474 = vpop.f32.mrf.mxu0
        %v475 = vadd.f32 0.0, %v474
        %476 = vdwg.mxu0
        %478 = vrot.lane.b32.xlu0 %v475, 120
        %v479 = vpop.permute.xlu0 %478
        %480 = vrot.lane.b32.xlu0 %v475, 112
        %v481 = vpop.permute.xlu0 %480
        %482 = vrot.lane.b32.xlu0 %v475, 104
        %v483 = vpop.permute.xlu0 %482
        %484 = vrot.lane.b32.xlu0 %v475, 96
        %v485 = vpop.permute.xlu0 %484
        %486 = vrot.lane.b32.xlu0 %v475, 88
        %v487 = vpop.permute.xlu0 %486
        %488 = vrot.lane.b32.xlu0 %v475, 80
        %v489 = vpop.permute.xlu0 %488
        %490 = vrot.lane.b32.xlu0 %v475, 72
        %v491 = vpop.permute.xlu0 %490
        %492 = vrot.lane.b32.xlu0 %v475, 64
        %v493 = vpop.permute.xlu0 %492
        %495 = vrot.lane.b32.xlu0 %v475, 56
        %v496 = vpop.permute.xlu0 %495
        %498 = vrot.lane.b32.xlu0 %v475, 48
        %v499 = vpop.permute.xlu0 %498
        %501 = vrot.lane.b32.xlu0 %v475, 40
        %v502 = vpop.permute.xlu0 %501
        %vm504 = vcmask 64512
        %v505 = vsel %vm504, %v475, 0
        %v507 = vsel %vm504, %v485, 0
        %509 = vmatpush.xpose.msra.mxu0 0.0
        %510 = vmatpush.xpose.msra.mxu0 0.0
        %511 = vmatpush.xpose.msra.mxu0 0.0
        %512 = vmatpush.xpose.msra.mxu0 0.0
        %513 = vmatpush.xpose.msra.mxu0 0.0
        %514 = vmatpush.xpose.msra.mxu0 0.0
        %515 = vmatpush.xpose.msra.mxu0 0.0
        %516 = vmatpush.xpose.msra.mxu0 0.0
        %517 = vmatpush.xpose.msra.mxu0 0.0
        %518 = vmatpush.xpose.msra.mxu0 0.0
        %519 = vmatpush.xpose.msra.mxu0 0.0
        %520 = vmatpush.xpose.msra.mxu0 0.0
        %521 = vmatpush.xpose.msra.mxu0 0.0
        %522 = vmatpush.xpose.msra.mxu0 0.0
        %523 = vmatpush.xpose.msra.mxu0 0.0
        %524 = vmatpush.xpose.msra.mxu0 %v507
        %525 = vmatmul.f32.gmra.mxu0 %v505
        %v526 = vpop.f32.mrf.mxu0
        %v527 = vadd.f32 0.0, %v526
        %528 = vdwg.mxu0
        %v529 = vsel %vm504, %v479, 0
        %v531 = vsel %vm504, %v487, 0
        %533 = vmatpush.xpose.msra.mxu0 0.0
        %534 = vmatpush.xpose.msra.mxu0 0.0
        %535 = vmatpush.xpose.msra.mxu0 0.0
        %536 = vmatpush.xpose.msra.mxu0 0.0
        %537 = vmatpush.xpose.msra.mxu0 0.0
        %538 = vmatpush.xpose.msra.mxu0 0.0
        %539 = vmatpush.xpose.msra.mxu0 0.0
        %540 = vmatpush.xpose.msra.mxu0 0.0
        %541 = vmatpush.xpose.msra.mxu0 0.0
        %542 = vmatpush.xpose.msra.mxu0 0.0
        %543 = vmatpush.xpose.msra.mxu0 0.0
        %544 = vmatpush.xpose.msra.mxu0 0.0
        %545 = vmatpush.xpose.msra.mxu0 0.0
        %546 = vmatpush.xpose.msra.mxu0 0.0
        %547 = vmatpush.xpose.msra.mxu0 0.0
        %548 = vmatpush.xpose.msra.mxu0 %v531
        %549 = vmatmul.f32.gmra.mxu0 %v529
        %v550 = vpop.f32.mrf.mxu0
        %v551 = vadd.f32 0.0, %v550
        %552 = vdwg.mxu0
        %v553 = vsel %vm504, %v481, 0
        %v555 = vsel %vm504, %v489, 0
        %557 = vmatpush.xpose.msra.mxu0 0.0
        %558 = vmatpush.xpose.msra.mxu0 0.0
        %559 = vmatpush.xpose.msra.mxu0 0.0
        %560 = vmatpush.xpose.msra.mxu0 0.0
        %561 = vmatpush.xpose.msra.mxu0 0.0
        %562 = vmatpush.xpose.msra.mxu0 0.0
        %563 = vmatpush.xpose.msra.mxu0 0.0
        %564 = vmatpush.xpose.msra.mxu0 0.0
        %565 = vmatpush.xpose.msra.mxu0 0.0
        %566 = vmatpush.xpose.msra.mxu0 0.0
        %567 = vmatpush.xpose.msra.mxu0 0.0
        %568 = vmatpush.xpose.msra.mxu0 0.0
        %569 = vmatpush.xpose.msra.mxu0 0.0
        %570 = vmatpush.xpose.msra.mxu0 0.0
        %571 = vmatpush.xpose.msra.mxu0 0.0
        %572 = vmatpush.xpose.msra.mxu0 %v555
        %573 = vmatmul.f32.gmra.mxu0 %v553
        %v574 = vpop.f32.mrf.mxu0
        %v575 = vadd.f32 0.0, %v574
        %576 = vdwg.mxu0
        %v577 = vsel %vm504, %v483, 0
        %v579 = vsel %vm504, %v491, 0
        %581 = vmatpush.xpose.msra.mxu0 0.0
        %582 = vmatpush.xpose.msra.mxu0 0.0
        %583 = vmatpush.xpose.msra.mxu0 0.0
        %584 = vmatpush.xpose.msra.mxu0 0.0
        %585 = vmatpush.xpose.msra.mxu0 0.0
        %586 = vmatpush.xpose.msra.mxu0 0.0
        %587 = vmatpush.xpose.msra.mxu0 0.0
        %588 = vmatpush.xpose.msra.mxu0 0.0
        %589 = vmatpush.xpose.msra.mxu0 0.0
        %590 = vmatpush.xpose.msra.mxu0 0.0
        %591 = vmatpush.xpose.msra.mxu0 0.0
        %592 = vmatpush.xpose.msra.mxu0 0.0
        %593 = vmatpush.xpose.msra.mxu0 0.0
        %594 = vmatpush.xpose.msra.mxu0 0.0
        %595 = vmatpush.xpose.msra.mxu0 0.0
        %596 = vmatpush.xpose.msra.mxu0 %v579
        %597 = vmatmul.f32.gmra.mxu0 %v577
        %v598 = vpop.f32.mrf.mxu0
        %v599 = vadd.f32 0.0, %v598
        %600 = vdwg.mxu0
        %v601 = vsel %vm504, %v527, -inf
        %602 = vmax.xlane.f32.xlu0 %v601
        %v603 = vpop.xlane.xlu0 %602
        %v604 = vsel %vm504, %v551, -inf
        %605 = vmax.xlane.f32.xlu0 %v604
        %v606 = vpop.xlane.xlu0 %605
        %v607 = vsel %vm504, %v575, -inf
        %608 = vmax.xlane.f32.xlu0 %v607
        %v609 = vpop.xlane.xlu0 %608
        %v610 = vsel %vm504, %v599, -inf
        %611 = vmax.xlane.f32.xlu0 %v610
        %v612 = vpop.xlane.xlu0 %611
        %v613 = vsub.f32 %v527, %v603
        %v614 = vsub.f32 %v551, %v606
        %v615 = vsub.f32 %v575, %v609
        %v616 = vsub.f32 %v599, %v612
        %v617 = vmul.f32 %v613, 1.442695
        %v618 = vpow.pop %v617
        %v619 = vmul.f32 %v614, 1.442695
        %v620 = vpow.pop %v619
        %v621 = vmul.f32 %v615, 1.442695
        %v622 = vpow.pop %v621
        %v623 = vmul.f32 %v616, 1.442695
        %v624 = vpow.pop %v623
        %v625 = vsel %vm504, %v618, 0.0
        %626 = vadd.xlane.f32.xlu0 %v625
        %v627 = vpop.xlane.xlu0 %626
        %v628 = vsel %vm504, %v620, 0.0
        %629 = vadd.xlane.f32.xlu0 %v628
        %v630 = vpop.xlane.xlu0 %629
        %v631 = vsel %vm504, %v622, 0.0
        %632 = vadd.xlane.f32.xlu0 %v631
        %v633 = vpop.xlane.xlu0 %632
        %v634 = vsel %vm504, %v624, 0.0
        %635 = vadd.xlane.f32.xlu0 %v634
        %v636 = vpop.xlane.xlu0 %635
        %v638 = vsel %vm504, %v618, 0
        %640 = vmatpush.msra.mxu0 0.0
        %641 = vmatpush.msra.mxu0 0.0
        %642 = vmatpush.msra.mxu0 0.0
        %643 = vmatpush.msra.mxu0 0.0
        %644 = vmatpush.msra.mxu0 0.0
        %645 = vmatpush.msra.mxu0 0.0
        %646 = vmatpush.msra.mxu0 0.0
        %647 = vmatpush.msra.mxu0 0.0
        %648 = vmatpush.msra.mxu0 0.0
        %649 = vmatpush.msra.mxu0 0.0
        %650 = vmatpush.msra.mxu0 0.0
        %651 = vmatpush.msra.mxu0 0.0
        %652 = vmatpush.msra.mxu0 0.0
        %653 = vmatpush.msra.mxu0 0.0
        %654 = vmatpush.msra.mxu0 0.0
        %655 = vmatpush.msra.mxu0 %v493
        %656 = vmatmul.f32.gmra.mxu0 %v638
        %v657 = vpop.f32.mrf.mxu0
        %v658 = vadd.f32 0.0, %v657
        %659 = vdwg.mxu0
        %v661 = vsel %vm504, %v620, 0
        %663 = vmatpush.msra.mxu0 0.0
        %664 = vmatpush.msra.mxu0 0.0
        %665 = vmatpush.msra.mxu0 0.0
        %666 = vmatpush.msra.mxu0 0.0
        %667 = vmatpush.msra.mxu0 0.0
        %668 = vmatpush.msra.mxu0 0.0
        %669 = vmatpush.msra.mxu0 0.0
        %670 = vmatpush.msra.mxu0 0.0
        %671 = vmatpush.msra.mxu0 0.0
        %672 = vmatpush.msra.mxu0 0.0
        %673 = vmatpush.msra.mxu0 0.0
        %674 = vmatpush.msra.mxu0 0.0
        %675 = vmatpush.msra.mxu0 0.0
        %676 = vmatpush.msra.mxu0 0.0
        %677 = vmatpush.msra.mxu0 0.0
        %678 = vmatpush.msra.mxu0 %v496
        %679 = vmatmul.f32.gmra.mxu0 %v661
        %v680 = vpop.f32.mrf.mxu0
        %v681 = vadd.f32 0.0, %v680
        %682 = vdwg.mxu0
        %v684 = vsel %vm504, %v622, 0
        %686 = vmatpush.msra.mxu0 0.0
        %687 = vmatpush.msra.mxu0 0.0
        %688 = vmatpush.msra.mxu0 0.0
        %689 = vmatpush.msra.mxu0 0.0
        %690 = vmatpush.msra.mxu0 0.0
        %691 = vmatpush.msra.mxu0 0.0
        %692 = vmatpush.msra.mxu0 0.0
        %693 = vmatpush.msra.mxu0 0.0
        %694 = vmatpush.msra.mxu0 0.0
        %695 = vmatpush.msra.mxu0 0.0
        %696 = vmatpush.msra.mxu0 0.0
        %697 = vmatpush.msra.mxu0 0.0
        %698 = vmatpush.msra.mxu0 0.0
        %699 = vmatpush.msra.mxu0 0.0
        %700 = vmatpush.msra.mxu0 0.0
        %701 = vmatpush.msra.mxu0 %v499
        %702 = vmatmul.f32.gmra.mxu0 %v684
        %v703 = vpop.f32.mrf.mxu0
        %v704 = vadd.f32 0.0, %v703
        %705 = vdwg.mxu0
        %v707 = vsel %vm504, %v624, 0
        %709 = vmatpush.msra.mxu0 0.0
        %710 = vmatpush.msra.mxu0 0.0
        %711 = vmatpush.msra.mxu0 0.0
        %712 = vmatpush.msra.mxu0 0.0
        %713 = vmatpush.msra.mxu0 0.0
        %714 = vmatpush.msra.mxu0 0.0
        %715 = vmatpush.msra.mxu0 0.0
        %716 = vmatpush.msra.mxu0 0.0
        %717 = vmatpush.msra.mxu0 0.0
        %718 = vmatpush.msra.mxu0 0.0
        %719 = vmatpush.msra.mxu0 0.0
        %720 = vmatpush.msra.mxu0 0.0
        %721 = vmatpush.msra.mxu0 0.0
        %722 = vmatpush.msra.mxu0 0.0
        %723 = vmatpush.msra.mxu0 0.0
        %724 = vmatpush.msra.mxu0 %v502
        %725 = vmatmul.f32.gmra.mxu0 %v707
        %v726 = vpop.f32.mrf.mxu0
        %v727 = vadd.f32 0.0, %v726
        %728 = vdwg.mxu0
        %v729 = vrcp.pop %v627
        %v730 = vmul.f32 %v627, %v729
        %v731 = vsub.f32 1.0, %v730
        %v732 = vmul.f32 %v729, %v731
        %v733 = vadd.f32 %v729, %v732
        %vm734 = vweird.f32 %v627
        %vm735 = vweird.f32 %v729
        %vm736 = vmor %vm734, %vm735
        %v737 = vsel %vm736, %v729, %v733
        %v738 = vand.u32 2147483647, %v627
        %vm739 = vcmp.eq.f32.partialorder %v738, 8.507059e+37
        %v740 = vand.u32 %v627, 2147483648
        %v741 = vor.u32 1.1754944e-38, %v740
        %v742 = vsel %vm739, %v741, %v737
        %v743 = vmul.f32 %v658, %v742
        %v744 = vrcp.pop %v630
        %v745 = vmul.f32 %v630, %v744
        %v746 = vsub.f32 1.0, %v745
        %v747 = vmul.f32 %v744, %v746
        %v748 = vadd.f32 %v744, %v747
        %vm749 = vweird.f32 %v630
        %vm750 = vweird.f32 %v744
        %vm751 = vmor %vm749, %vm750
        %v752 = vsel %vm751, %v744, %v748
        %v753 = vand.u32 2147483647, %v630
        %vm754 = vcmp.eq.f32.partialorder %v753, 8.507059e+37
        %v755 = vand.u32 %v630, 2147483648
        %v756 = vor.u32 1.1754944e-38, %v755
        %v757 = vsel %vm754, %v756, %v752
        %v758 = vmul.f32 %v681, %v757
        %v759 = vrcp.pop %v633
        %v760 = vmul.f32 %v633, %v759
        %v761 = vsub.f32 1.0, %v760
        %v762 = vmul.f32 %v759, %v761
        %v763 = vadd.f32 %v759, %v762
        %vm764 = vweird.f32 %v633
        %vm765 = vweird.f32 %v759
        %vm766 = vmor %vm764, %vm765
        %v767 = vsel %vm766, %v759, %v763
        %v768 = vand.u32 2147483647, %v633
        %vm769 = vcmp.eq.f32.partialorder %v768, 8.507059e+37
        %v770 = vand.u32 %v633, 2147483648
        %v771 = vor.u32 1.1754944e-38, %v770
        %v772 = vsel %vm769, %v771, %v767
        %v773 = vmul.f32 %v704, %v772
        %v774 = vrcp.pop %v636
        %v775 = vmul.f32 %v636, %v774
        %v776 = vsub.f32 1.0, %v775
        %v777 = vmul.f32 %v774, %v776
        %v778 = vadd.f32 %v774, %v777
        %vm779 = vweird.f32 %v636
        %vm780 = vweird.f32 %v774
        %vm781 = vmor %vm779, %vm780
        %v782 = vsel %vm781, %v774, %v778
        %v783 = vand.u32 2147483647, %v636
        %vm784 = vcmp.eq.f32.partialorder %v783, 8.507059e+37
        %v785 = vand.u32 %v636, 2147483648
        %v786 = vor.u32 1.1754944e-38, %v785
        %v787 = vsel %vm784, %v786, %v782
        %v788 = vmul.f32 %v727, %v787
        %789 = vst.msk [vmem:[#allocation2] sm:$0xff] %vm504, %v743
        %791 = vrot.lane.b32.xlu0 %v758, 8
        %v792 = vpop.permute.xlu0 %791
        %vm794 = vcmask 130112
        %795 = vst.msk [vmem:[#allocation2] sm:$0xff] %vm794, %v792
        %797 = vrot.lane.b32.xlu0 %v773, 16
        %v798 = vpop.permute.xlu0 %797
        %vm800 = vcmask 195712
        %801 = vst.msk [vmem:[#allocation2] sm:$0xff] %vm800, %v798
        %803 = vrot.lane.b32.xlu0 %v788, 24
        %v804 = vpop.permute.xlu0 %803
        %vm806 = vcmask 261312
        %807 = vst.msk [vmem:[#allocation2] sm:$0xff] %vm806, %v804
        %v808 = vld [vmem:[#allocation2] sm:$0xff]
        %v809 = vld [vmem:[%s4] sm:$0xff]
        %v810 = vld [vmem:[%s4 + $0x8] sm:$0xff]
        %v811 = vld [vmem:[%s4 + $0x10] sm:$0xff]
        %v812 = vld [vmem:[%s4 + $0x18] sm:$0xff]
        %v813 = vld [vmem:[%s5] sm:$0x1]
        %v815 = vperm.slane %v813, 0
        %v818 = vsel %vm412, %v808, 0
        %820 = vmatpush.msra.mxu0 0.0
        %821 = vmatpush.msra.mxu0 0.0
        %822 = vmatpush.msra.mxu0 0.0
        %823 = vmatpush.msra.mxu0 0.0
        %824 = vmatpush.msra.mxu0 0.0
        %825 = vmatpush.msra.mxu0 0.0
        %826 = vmatpush.msra.mxu0 0.0
        %827 = vmatpush.msra.mxu0 0.0
        %828 = vmatpush.msra.mxu0 0.0
        %829 = vmatpush.msra.mxu0 0.0
        %830 = vmatpush.msra.mxu0 0.0
        %831 = vmatpush.msra.mxu0 0.0
        %832 = vmatpush.msra.mxu0 %v812
        %833 = vmatpush.msra.mxu0 %v811
        %834 = vmatpush.msra.mxu0 %v810
        %835 = vmatpush.msra.mxu0 %v809
        %836 = vmatmul.f32.gmra.mxu0 %v818
        %v837 = vpop.f32.mrf.mxu0
        %v838 = vadd.f32 %v815, %v837
        %839 = vdwg.mxu0
        %v840 = vadd.f32 %v409, %v838
        %v841 = vld [vmem:[%s6] sm:$0x1]
        %v842 = vld [vmem:[%s7] sm:$0x1]
        %v843 = vsel %vm412, %v840, 0.0
        %844 = vadd.xlane.f32.xlu0 %v843
        %v845 = vpop.xlane.xlu0 %844
        %v846 = vmul.f32 %v845, %v422
        %v847 = vsub.f32 %v840, %v846
        %v848 = vmul.f32 %v847, %v847
        %v849 = vsel %vm412, %v848, 0.0
        %850 = vadd.xlane.f32.xlu0 %v849
        %v851 = vpop.xlane.xlu0 %850
        %v852 = vmul.f32 %v851, %v422
        %v853 = vadd.f32 %v852, 1e-05
        %v854 = vrsqrt.pop %v853
        %v855 = vmul.f32 %v854, %v853
        %v856 = vmul.f32 %v855, %v854
        %v857 = vmul.f32 0.5, %v856
        %v858 = vsub.f32 1.5, %v857
        %v859 = vmul.f32 %v854, %v858
        %vm860 = vweird.f32 %v853
        %vm861 = vweird.f32 %v854
        %vm862 = vmor %vm860, %vm861
        %v863 = vsel %vm862, %v854, %v859
        %v864 = vmul.f32 %v847, %v863
        %v866 = vperm.slane %v841, 0
        %v868 = vmul.f32 %v864, %v866
        %v870 = vperm.slane %v842, 0
        %v872 = vadd.f32 %v868, %v870
        %v873 = vld [vmem:[%s8] sm:$0xff]
        %v874 = vld [vmem:[%s8 + $0x8] sm:$0xff]
        %v875 = vld [vmem:[%s8 + $0x10] sm:$0xff]
        %v876 = vld [vmem:[%s8 + $0x18] sm:$0xff]
        %v877 = vld [vmem:[%s9] sm:$0x1]
        %v879 = vperm.slane %v877, 0
        %v882 = vsel %vm412, %v872, 0
        %884 = vmatpush.msra.mxu0 0.0
        %885 = vmatpush.msra.mxu0 0.0
        %886 = vmatpush.msra.mxu0 0.0
        %887 = vmatpush.msra.mxu0 0.0
        %888 = vmatpush.msra.mxu0 0.0
        %889 = vmatpush.msra.mxu0 0.0
        %890 = vmatpush.msra.mxu0 0.0
        %891 = vmatpush.msra.mxu0 0.0
        %892 = vmatpush.msra.mxu0 0.0
        %893 = vmatpush.msra.mxu0 0.0
        %894 = vmatpush.msra.mxu0 0.0
        %895 = vmatpush.msra.mxu0 0.0
        %896 = vmatpush.msra.mxu0 %v876
        %897 = vmatpush.msra.mxu0 %v875
        %898 = vmatpush.msra.mxu0 %v874
        %899 = vmatpush.msra.mxu0 %v873
        %900 = vmatmul.f32.gmra.mxu0 %v882
        %v901 = vpop.f32.mrf.mxu0
        %v902 = vadd.f32 %v879, %v901
        %903 = vdwg.mxu0
        %v904 = vmul.f32 %v902, 0.5
        %v905 = vmul.f32 %v902, 0.70710677
        %v906 = vmul.f32 %v905, %v905
        %v907 = vmin.f32 16.0, %v906
        %v908 = vmul.f32 %v907, 2.1237322e-06
        %v909 = vadd.f32 %v908, 0.00028619796
        %v910 = vmul.f32 %v907, %v909
        %v911 = vadd.f32 %v910, 0.0036580483
        %v912 = vmul.f32 %v907, %v911
        %v913 = vadd.f32 %v912, 0.05243302
        %v914 = vmul.f32 %v907, %v913
        %v915 = vadd.f32 %v914, 0.18741608
        %v916 = vmul.f32 %v907, %v915
        %v917 = vadd.f32 %v916, 1.1283791
        %v918 = vmul.f32 %v905, %v917
        %v919 = vmul.f32 %v907, 3.8918573e-05
        %v920 = vadd.f32 %v919, 0.001143296
        %v921 = vmul.f32 %v907, %v920
        %v922 = vadd.f32 %v921, 0.014752088
        %v923 = vmul.f32 %v907, %v922
        %v924 = vadd.f32 %v923, 0.112945676
        %v925 = vmul.f32 %v907, %v924
        %v926 = vadd.f32 %v925, 0.4994258
        %v927 = vmul.f32 %v907, %v926
        %v928 = vadd.f32 %v927, 1.0
        %v929 = vrcp.pop %v928
        %v930 = vmul.f32 %v928, %v929
        %v931 = vsub.f32 1.0, %v930
        %v932 = vmul.f32 %v929, %v931
        %v933 = vadd.f32 %v929, %v932
        %vm934 = vweird.f32 %v928
        %vm935 = vweird.f32 %v929
        %vm936 = vmor %vm934, %vm935
        %v937 = vsel %vm936, %v929, %v933
        %v938 = vand.u32 2147483647, %v928
        %vm939 = vcmp.eq.f32.partialorder %v938, 8.507059e+37
        %v940 = vand.u32 %v928, 2147483648
        %v941 = vor.u32 1.1754944e-38, %v940
        %v942 = vsel %vm939, %v941, %v937
        %v943 = vmul.f32 %v918, %v942
        %v944 = vmin.f32 %v943, 1.0
        %v945 = vmax.f32 %v944, -1.0
        %v946 = vadd.f32 %v945, 1.0
        %v947 = vmul.f32 %v904, %v946
        %v948 = vld [vmem:[%s10] sm:$0xff]
        %v949 = vld [vmem:[%s10 + $0x8] sm:$0xff]
        %v950 = vld [vmem:[%s10 + $0x10] sm:$0xff]
        %v951 = vld [vmem:[%s10 + $0x18] sm:$0xff]
        %v952 = vld [vmem:[%s10 + $0x20] sm:$0xff]
        %v953 = vld [vmem:[%s10 + $0x28] sm:$0xff]
        %v954 = vld [vmem:[%s10 + $0x30] sm:$0xff]
        %v955 = vld [vmem:[%s10 + $0x38] sm:$0xff]
        %v956 = vld [vmem:[%s10 + $0x40] sm:$0xff]
        %v957 = vld [vmem:[%s10 + $0x48] sm:$0xff]
        %v958 = vld [vmem:[%s10 + $0x50] sm:$0xff]
        %v959 = vld [vmem:[%s10 + $0x58] sm:$0xff]
        %v960 = vld [vmem:[%s10 + $0x60] sm:$0xff]
        %v961 = vld [vmem:[%s10 + $0x68] sm:$0xff]
        %v962 = vld [vmem:[%s10 + $0x70] sm:$0xff]
        %v963 = vld [vmem:[%s10 + $0x78] sm:$0xff]
        %v964 = vld [vmem:[%s11] sm:$0x1]
        %v966 = vperm.slane %v964, 0
        %968 = vmatpush.msra.mxu0 %v963
        %969 = vmatpush.msra.mxu0 %v962
        %970 = vmatpush.msra.mxu0 %v961
        %971 = vmatpush.msra.mxu0 %v960
        %972 = vmatpush.msra.mxu0 %v959
        %973 = vmatpush.msra.mxu0 %v958
        %974 = vmatpush.msra.mxu0 %v957
        %975 = vmatpush.msra.mxu0 %v956
        %976 = vmatpush.msra.mxu0 %v955
        %977 = vmatpush.msra.mxu0 %v954
        %978 = vmatpush.msra.mxu0 %v953
        %979 = vmatpush.msra.mxu0 %v952
        %980 = vmatpush.msra.mxu0 %v951
        %981 = vmatpush.msra.mxu0 %v950
        %982 = vmatpush.msra.mxu0 %v949
        %983 = vmatpush.msra.mxu0 %v948
        %984 = vmatmul.f32.gmra.mxu0 %v947
        %v985 = vpop.f32.mrf.mxu0
        %v986 = vadd.f32 %v966, %v985
        %987 = vdwg.mxu0
        %v988 = vadd.f32 %v840, %v986
        %989 = vst.msk [vmem:[%s404] sm:$0xff] %vm412, %v988
        %s990 = sand.u32 %s291, 1
        %s991 = scalar_lea.sflag [#allocation4], %s990
        %s992 = sand.u32 %s291, 1
        %s993 = smul.addr %s992, 8
        %s994 = scalar_lea.vmem [#allocation3], %s993
        // Predicated region
        $region69: #{tpu_custom_call.1} parent=67 // pred_check
          %p995 = pneg %p301
        $region70: #{tpu_custom_call.1} parent=67 // pred_check_branch
          %997 = sbr.rel (%p995) target = $region72
        $region71: #{tpu_custom_call.1} parent=67 // pred_region
          %999 = vsyncadd %s991, 0
          %s1000 = smul.addr %s26, 8
          %s1001 = scalar_lea.hbm %s12, %s1000
          %s1003 = sshll.u32 %s994, 4
          %s1004 = int_to_ptr.vmem [resolvable:$true] %s1003
          %s1005 = sshll.u32 %s1001, 4
          %s1006 = int_to_ptr.hbm [resolvable:$true] %s1005
          %1008 = dma.vmem_to_hbm [thread:$0]  %s1004, 128, %s1006, %s991
        $region72: #{tpu_custom_call.1} parent=67 // pred_fallthru
          _
      $region68: #{tpu_custom_call.1} parent=5 // pred_fallthru
        _
      %p1009 = scmp.le.s32.totalorder 2, %s21
      // Predicated region
      $region73: #{tpu_custom_call.1} parent=5 // pred_check
        %p1010 = pneg %p1009
      $region74: #{tpu_custom_call.1} parent=5 // pred_check_branch
        %1012 = sbr.rel (%p1010) target = $region76
      $region75: #{tpu_custom_call.1} parent=5 // pred_region
        %s1013 = ssub.s32 %s21, 2
        // Predicated region
        $region77: #{tpu_custom_call.1} parent=75 // pred_check
          %p1014 = pneg %p307
        $region78: #{tpu_custom_call.1} parent=75 // pred_check_branch
          %1016 = sbr.rel (%p1014) target = $region80
        $region79: #{tpu_custom_call.1} parent=75 // pred_region
          %s1017 = sand.u32 %s292, 1
          %s1018 = scalar_lea.sflag [#allocation4], %s1017
          %s1019 = sand.u32 %s292, 1
          %s1020 = smul.addr %s1019, 8
          %s1021 = scalar_lea.vmem [#allocation3], %s1020
          %1023 = dma.done %s1018, 128
        $region80: #{tpu_custom_call.1} parent=75 // pred_fallthru
          _
      $region76: #{tpu_custom_call.1} parent=5 // pred_fallthru
        _
    $region6: #{tpu_custom_call.1} parent=1 // loop_footer
      %s25 = sadd.s32 1, %s21
    $region7: #{tpu_custom_call.1} parent=1 // loop_footer_branch
      %20 = sbr.rel target = $region3
    $region8: #{tpu_custom_call.1} parent=1 // loop_exit
      _
    %1024 = vsyncpa [#allocation4], 1
    %s1025 = scalar_lea.sflag [#allocation4], 1
    %1026 = vsyncpa %s1025, 1

// kernel: tpu_custom_call.1
$region0: #{tpu_custom_call.1}
  #allocation0 [shape = 'u32[]', space=smem, size = 0x4, offset = 0x4, fixed_abs, tag = 'smem constant byte address 0x4 - core index']
  #allocation1 [shape = 'u32[72,128]{1,0:T(1,128)}', space=vmem, size = 0x9000, scoped, tag = 'internal scratch']
  #allocation2 [shape = 'f32[8,32]{1,0:T(8,128)}', space=vmem, size = 0x1000, scoped, tag = 'scratch operand']
  %s0 = inlined_call_operand.vmem [shape: f32[2,8,32], index: 0, kind: input, shape index: {}]
  %s1 = inlined_call_operand.vmem [shape: f32[1,32], index: 1, kind: input, shape index: {}]
  %s2 = inlined_call_operand.vmem [shape: f32[1,32], index: 2, kind: input, shape index: {}]
  %s3 = inlined_call_operand.vmem [shape: f32[32,96], index: 3, kind: input, shape index: {}]
  %s4 = inlined_call_operand.vmem [shape: f32[32,32], index: 4, kind: input, shape index: {}]
  %s5 = inlined_call_operand.vmem [shape: f32[1,32], index: 5, kind: input, shape index: {}]
  %s6 = inlined_call_operand.vmem [shape: f32[1,32], index: 6, kind: input, shape index: {}]
  %s7 = inlined_call_operand.vmem [shape: f32[1,32], index: 7, kind: input, shape index: {}]
  %s8 = inlined_call_operand.vmem [shape: f32[32,128], index: 8, kind: input, shape index: {}]
  %s9 = inlined_call_operand.vmem [shape: f32[1,128], index: 9, kind: input, shape index: {}]
  %s10 = inlined_call_operand.vmem [shape: f32[128,32], index: 10, kind: input, shape index: {}]
  %s11 = inlined_call_operand.vmem [shape: f32[1,32], index: 11, kind: input, shape index: {}]
  %s12 = inlined_call_operand.hbm [shape: f32[2,8,32], index: 12, kind: output, shape index: {}]
  %s13 = sld [smem:[#allocation0]]
  $region81: #{tpu_custom_call.1} parent=0
    _
  %s15 = ssub.s32 1, %s13
  %s16 = scalar_select 0, %s15, %s13
  $region1: #{tpu_custom_call.1} parent=0
    #allocation3 [shape = 'u8[8192]{0}', space=vmem, size = 0x2000, scoped, tag = 'output window, operand 0']
    #allocation4 [shape = 's32[2]{0}', space=sflag, size = 0x8, scoped, tag = 'scoped memory for tpu_custom_call.1']
    %17 = vsyncpa [#allocation4], 0
    %s18 = scalar_lea.sflag [#allocation4], 1
    %19 = vsyncpa %s18, 0
    loop: start=0, step=1, limit=4
    $region2: #{tpu_custom_call.1} parent=1 // loop_pre_header
      _
    $region3: #{tpu_custom_call.1} parent=1 // loop_header
      %s21 = sphi 0, %s25
      %p22 = scmp.ge.s32.totalorder %s21, 4
      %s31 = sphi 0, %s33
      %s34 = sphi 0, %s31
      %s35 = sphi 0, %s34
      %s51 = sphi 0, %s35
      %s55 = sphi 0, %s55
      %s57 = sphi 0, %s55
      %s58 = sphi 0, %s57
      %s72 = sphi 0, %s58
      %s76 = sphi 0, %s76
      %s78 = sphi 0, %s76
      %s79 = sphi 0, %s78
      %s93 = sphi 0, %s79
      %s97 = sphi 0, %s97
      %s99 = sphi 0, %s97
      %s100 = sphi 0, %s99
      %s114 = sphi 0, %s100
      %s118 = sphi 0, %s118
      %s120 = sphi 0, %s118
      %s121 = sphi 0, %s120
      %s135 = sphi 0, %s121
      %s139 = sphi 0, %s139
      %s141 = sphi 0, %s139
      %s142 = sphi 0, %s141
      %s156 = sphi 0, %s142
      %s160 = sphi 0, %s160
      %s162 = sphi 0, %s160
      %s163 = sphi 0, %s162
      %s177 = sphi 0, %s163
      %s181 = sphi 0, %s181
      %s183 = sphi 0, %s181
      %s184 = sphi 0, %s183
      %s198 = sphi 0, %s184
      %s202 = sphi 0, %s202
      %s204 = sphi 0, %s202
      %s205 = sphi 0, %s204
      %s219 = sphi 0, %s205
      %s223 = sphi 0, %s223
      %s225 = sphi 0, %s223
      %s226 = sphi 0, %s225
      %s240 = sphi 0, %s226
      %s244 = sphi 0, %s244
      %s246 = sphi 0, %s244
      %s247 = sphi 0, %s246
      %s261 = sphi 0, %s247
      %s265 = sphi 0, %s265
      %s267 = sphi 0, %s265
      %s268 = sphi 0, %s267
      %s282 = sphi 0, %s268
      %s288 = sphi 0, %s290
      %s291 = sphi 0, %s288
      %s292 = sphi 0, %s291
      %s308 = sphi 0, %s292
    $region4: #{tpu_custom_call.1} parent=1 // loop_header_branch
      %24 = sbr.rel (%p22) target = $region8
    $region5: #{tpu_custom_call.1} parent=1 // loop_body
      %s26 = ssub.s32 %s21, 1
      %s27 = ssub.s32 %s21, 2
      %s28 = sadd.s32 %s21, 1
      %s29 = ssub.s32 %s21, %s28
      %p30 = scmp.eq.s32.totalorder %s29, 0
      %s32 = sadd.s32 %s31, 1
      %s33 = scalar_select %p30, %s31, %s32
      %p36 = pneg %p30
      %p37 = scmp.eq.s32.totalorder %s21, 1
      %p38 = por %p36, %p37
      %p39 = scmp.ne.s32.totalorder %s31, %s34
      %p40 = scmp.eq.s32.totalorder %s21, 0
      %p41 = por %p39, %p40
      %p42 = scmp.ne.s32.totalorder %s31, %s34
      %p43 = scmp.eq.s32.totalorder %s26, 1
      %p44 = por %p42, %p43
      %p45 = scmp.ne.s32.totalorder %s34, %s35
      %p46 = scmp.eq.s32.totalorder %s26, 0
      %p47 = por %p45, %p46
      %p48 = scmp.ne.s32.totalorder %s34, %s35
      %p49 = scmp.eq.s32.totalorder %s27, 1
      %p50 = por %p48, %p49
      %p52 = scmp.ne.s32.totalorder %s35, %s51
      %p53 = scmp.eq.s32.totalorder %s27, 0
      %p54 = por %p52, %p53
      %s56 = sadd.s32 %s55, 1
      %p59 = scmp.eq.s32.totalorder %s21, 1
      %p60 = scmp.ne.s32.totalorder %s55, %s57
      %p61 = scmp.eq.s32.totalorder %s21, 0
      %p62 = por %p60, %p61
      %p63 = scmp.ne.s32.totalorder %s55, %s57
      %p64 = scmp.eq.s32.totalorder %s26, 1
      %p65 = por %p63, %p64
      %p66 = scmp.ne.s32.totalorder %s57, %s58
      %p67 = scmp.eq.s32.totalorder %s26, 0
      %p68 = por %p66, %p67
      %p69 = scmp.ne.s32.totalorder %s57, %s58
      %p70 = scmp.eq.s32.totalorder %s27, 1
      %p71 = por %p69, %p70
      %p73 = scmp.ne.s32.totalorder %s58, %s72
      %p74 = scmp.eq.s32.totalorder %s27, 0
      %p75 = por %p73, %p74
      %s77 = sadd.s32 %s76, 1
      %p80 = scmp.eq.s32.totalorder %s21, 1
      %p81 = scmp.ne.s32.totalorder %s76, %s78
      %p82 = scmp.eq.s32.totalorder %s21, 0
      %p83 = por %p81, %p82
      %p84 = scmp.ne.s32.totalorder %s76, %s78
      %p85 = scmp.eq.s32.totalorder %s26, 1
      %p86 = por %p84, %p85
      %p87 = scmp.ne.s32.totalorder %s78, %s79
      %p88 = scmp.eq.s32.totalorder %s26, 0
      %p89 = por %p87, %p88
      %p90 = scmp.ne.s32.totalorder %s78, %s79
      %p91 = scmp.eq.s32.totalorder %s27, 1
      %p92 = por %p90, %p91
      %p94 = scmp.ne.s32.totalorder %s79, %s93
      %p95 = scmp.eq.s32.totalorder %s27, 0
      %p96 = por %p94, %p95
      %s98 = sadd.s32 %s97, 1
      %p101 = scmp.eq.s32.totalorder %s21, 1
      %p102 = scmp.ne.s32.totalorder %s97, %s99
      %p103 = scmp.eq.s32.totalorder %s21, 0
      %p104 = por %p102, %p103
      %p105 = scmp.ne.s32.totalorder %s97, %s99
      %p106 = scmp.eq.s32.totalorder %s26, 1
      %p107 = por %p105, %p106
      %p108 = scmp.ne.s32.totalorder %s99, %s100
      %p109 = scmp.eq.s32.totalorder %s26, 0
      %p110 = por %p108, %p109
      %p111 = scmp.ne.s32.totalorder %s99, %s100
      %p112 = scmp.eq.s32.totalorder %s27, 1
      %p113 = por %p111, %p112
      %p115 = scmp.ne.s32.totalorder %s100, %s114
      %p116 = scmp.eq.s32.totalorder %s27, 0
      %p117 = por %p115, %p116
      %s119 = sadd.s32 %s118, 1
      %p122 = scmp.eq.s32.totalorder %s21, 1
      %p123 = scmp.ne.s32.totalorder %s118, %s120
      %p124 = scmp.eq.s32.totalorder %s21, 0
      %p125 = por %p123, %p124
      %p126 = scmp.ne.s32.totalorder %s118, %s120
      %p127 = scmp.eq.s32.totalorder %s26, 1
      %p128 = por %p126, %p127
      %p129 = scmp.ne.s32.totalorder %s120, %s121
      %p130 = scmp.eq.s32.totalorder %s26, 0
      %p131 = por %p129, %p130
      %p132 = scmp.ne.s32.totalorder %s120, %s121
      %p133 = scmp.eq.s32.totalorder %s27, 1
      %p134 = por %p132, %p133
      %p136 = scmp.ne.s32.totalorder %s121, %s135
      %p137 = scmp.eq.s32.totalorder %s27, 0
      %p138 = por %p136, %p137
      %s140 = sadd.s32 %s139, 1
      %p143 = scmp.eq.s32.totalorder %s21, 1
      %p144 = scmp.ne.s32.totalorder %s139, %s141
      %p145 = scmp.eq.s32.totalorder %s21, 0
      %p146 = por %p144, %p145
      %p147 = scmp.ne.s32.totalorder %s139, %s141
      %p148 = scmp.eq.s32.totalorder %s26, 1
      %p149 = por %p147, %p148
      %p150 = scmp.ne.s32.totalorder %s141, %s142
      %p151 = scmp.eq.s32.totalorder %s26, 0
      %p152 = por %p150, %p151
      %p153 = scmp.ne.s32.totalorder %s141, %s142
      %p154 = scmp.eq.s32.totalorder %s27, 1
      %p155 = por %p153, %p154
      %p157 = scmp.ne.s32.totalorder %s142, %s156
      %p158 = scmp.eq.s32.totalorder %s27, 0
      %p159 = por %p157, %p158
      %s161 = sadd.s32 %s160, 1
      %p164 = scmp.eq.s32.totalorder %s21, 1
      %p165 = scmp.ne.s32.totalorder %s160, %s162
      %p166 = scmp.eq.s32.totalorder %s21, 0
      %p167 = por %p165, %p166
      %p168 = scmp.ne.s32.totalorder %s160, %s162
      %p169 = scmp.eq.s32.totalorder %s26, 1
      %p170 = por %p168, %p169
      %p171 = scmp.ne.s32.totalorder %s162, %s163
      %p172 = scmp.eq.s32.totalorder %s26, 0
      %p173 = por %p171, %p172
      %p174 = scmp.ne.s32.totalorder %s162, %s163
      %p175 = scmp.eq.s32.totalorder %s27, 1
      %p176 = por %p174, %p175
      %p178 = scmp.ne.s32.totalorder %s163, %s177
      %p179 = scmp.eq.s32.totalorder %s27, 0
      %p180 = por %p178, %p179
      %s182 = sadd.s32 %s181, 1
      %p185 = scmp.eq.s32.totalorder %s21, 1
      %p186 = scmp.ne.s32.totalorder %s181, %s183
      %p187 = scmp.eq.s32.totalorder %s21, 0
      %p188 = por %p186, %p187
      %p189 = scmp.ne.s32.totalorder %s181, %s183
      %p190 = scmp.eq.s32.totalorder %s26, 1
      %p191 = por %p189, %p190
      %p192 = scmp.ne.s32.totalorder %s183, %s184
      %p193 = scmp.eq.s32.totalorder %s26, 0
      %p194 = por %p192, %p193
      %p195 = scmp.ne.s32.totalorder %s183, %s184
      %p196 = scmp.eq.s32.totalorder %s27, 1
      %p197 = por %p195, %p196
      %p199 = scmp.ne.s32.totalorder %s184, %s198
      %p200 = scmp.eq.s32.totalorder %s27, 0
      %p201 = por %p199, %p200
      %s203 = sadd.s32 %s202, 1
      %p206 = scmp.eq.s32.totalorder %s21, 1
      %p207 = scmp.ne.s32.totalorder %s202, %s204
      %p208 = scmp.eq.s32.totalorder %s21, 0
      %p209 = por %p207, %p208
      %p210 = scmp.ne.s32.totalorder %s202, %s204
      %p211 = scmp.eq.s32.totalorder %s26, 1
      %p212 = por %p210, %p211
      %p213 = scmp.ne.s32.totalorder %s204, %s205
      %p214 = scmp.eq.s32.totalorder %s26, 0
      %p215 = por %p213, %p214
      %p216 = scmp.ne.s32.totalorder %s204, %s205
      %p217 = scmp.eq.s32.totalorder %s27, 1
      %p218 = por %p216, %p217
      %p220 = scmp.ne.s32.totalorder %s205, %s219
      %p221 = scmp.eq.s32.totalorder %s27, 0
      %p222 = por %p220, %p221
      %s224 = sadd.s32 %s223, 1
      %p227 = scmp.eq.s32.totalorder %s21, 1
      %p228 = scmp.ne.s32.totalorder %s223, %s225
      %p229 = scmp.eq.s32.totalorder %s21, 0
      %p230 = por %p228, %p229
      %p231 = scmp.ne.s32.totalorder %s223, %s225
      %p232 = scmp.eq.s32.totalorder %s26, 1
      %p233 = por %p231, %p232
      %p234 = scmp.ne.s32.totalorder %s225, %s226
      %p235 = scmp.eq.s32.totalorder %s26, 0
      %p236 = por %p234, %p235
      %p237 = scmp.ne.s32.totalorder %s225, %s226
      %p238 = scmp.eq.s32.totalorder %s27, 1
      %p239 = por %p237, %p238
      %p241 = scmp.ne.s32.totalorder %s226, %s240
      %p242 = scmp.eq.s32.totalorder %s27, 0
      %p243 = por %p241, %p242
      %s245 = sadd.s32 %s244, 1
      %p248 = scmp.eq.s32.totalorder %s21, 1
      %p249 = scmp.ne.s32.totalorder %s244, %s246
      %p250 = scmp.eq.s32.totalorder %s21, 0
      %p251 = por %p249, %p250
      %p252 = scmp.ne.s32.totalorder %s244, %s246
      %p253 = scmp.eq.s32.totalorder %s26, 1
      %p254 = por %p252, %p253
      %p255 = scmp.ne.s32.totalorder %s246, %s247
      %p256 = scmp.eq.s32.totalorder %s26, 0
      %p257 = por %p255, %p256
      %p258 = scmp.ne.s32.totalorder %s246, %s247
      %p259 = scmp.eq.s32.totalorder %s27, 1
      %p260 = por %p258, %p259
      %p262 = scmp.ne.s32.totalorder %s247, %s261
      %p263 = scmp.eq.s32.totalorder %s27, 0
      %p264 = por %p262, %p263
      %s266 = sadd.s32 %s265, 1
      %p269 = scmp.eq.s32.totalorder %s21, 1
      %p270 = scmp.ne.s32.totalorder %s265, %s267
      %p271 = scmp.eq.s32.totalorder %s21, 0
      %p272 = por %p270, %p271
      %p273 = scmp.ne.s32.totalorder %s265, %s267
      %p274 = scmp.eq.s32.totalorder %s26, 1
      %p275 = por %p273, %p274
      %p276 = scmp.ne.s32.totalorder %s267, %s268
      %p277 = scmp.eq.s32.totalorder %s26, 0
      %p278 = por %p276, %p277
      %p279 = scmp.ne.s32.totalorder %s267, %s268
      %p280 = scmp.eq.s32.totalorder %s27, 1
      %p281 = por %p279, %p280
      %p283 = scmp.ne.s32.totalorder %s268, %s282
      %p284 = scmp.eq.s32.totalorder %s27, 0
      %p285 = por %p283, %p284
      %s286 = ssub.s32 %s21, %s28
      %p287 = scmp.eq.s32.totalorder %s286, 0
      %s289 = sadd.s32 %s288, 1
      %s290 = scalar_select %p287, %s288, %s289
      %p293 = pneg %p287
      %p294 = scmp.eq.s32.totalorder %s21, 1
      %p295 = por %p293, %p294
      %p296 = scmp.ne.s32.totalorder %s288, %s291
      %p297 = scmp.eq.s32.totalorder %s21, 0
      %p298 = por %p296, %p297
      %p299 = scmp.ne.s32.totalorder %s288, %s291
      %p300 = scmp.eq.s32.totalorder %s26, 1
      %p301 = por %p299, %p300
      %p302 = scmp.ne.s32.totalorder %s291, %s292
      %p303 = scmp.eq.s32.totalorder %s26, 0
      %p304 = por %p302, %p303
      %p305 = scmp.ne.s32.totalorder %s291, %s292
      %p306 = scmp.eq.s32.totalorder %s27, 1
      %p307 = por %p305, %p306
      %p309 = scmp.ne.s32.totalorder %s292, %s308
      %p310 = scmp.eq.s32.totalorder %s27, 0
      %p311 = por %p309, %p310
      %p312 = scmp.le.s32.totalorder 1, %s21
      %p313 = scmp.lt.s32.totalorder %s21, 3
      %p314 = pnand %p312, %p313
      %p315 = pneg %p314
      // Predicated region
      $region9: #{tpu_custom_call.1} parent=5 // pred_check
        _
      $region10: #{tpu_custom_call.1} parent=5 // pred_check_branch
        %317 = sbr.rel (%p314) target = $region12
      $region11: #{tpu_custom_call.1} parent=5 // pred_region
        %s318 = ssub.s32 %s21, 1
        // Predicated region
        $region13: #{tpu_custom_call.1} parent=11 // pred_check
          %p319 = pneg %p68
        $region14: #{tpu_custom_call.1} parent=11 // pred_check_branch
          %321 = sbr.rel (%p319) target = $region16
        $region15: #{tpu_custom_call.1} parent=11 // pred_region
          _
        $region16: #{tpu_custom_call.1} parent=11 // pred_fallthru
          _
        // Predicated region
        $region17: #{tpu_custom_call.1} parent=11 // pred_check
          %p322 = pneg %p89
        $region18: #{tpu_custom_call.1} parent=11 // pred_check_branch
          %324 = sbr.rel (%p322) target = $region20
        $region19: #{tpu_custom_call.1} parent=11 // pred_region
          _
        $region20: #{tpu_custom_call.1} parent=11 // pred_fallthru
          _
        // Predicated region
        $region21: #{tpu_custom_call.1} parent=11 // pred_check
          %p325 = pneg %p110
        $region22: #{tpu_custom_call.1} parent=11 // pred_check_branch
          %327 = sbr.rel (%p325) target = $region24
        $region23: #{tpu_custom_call.1} parent=11 // pred_region
          _
        $region24: #{tpu_custom_call.1} parent=11 // pred_fallthru
          _
        // Predicated region
        $region25: #{tpu_custom_call.1} parent=11 // pred_check
          %p328 = pneg %p131
        $region26: #{tpu_custom_call.1} parent=11 // pred_check_branch
          %330 = sbr.rel (%p328) target = $region28
        $region27: #{tpu_custom_call.1} parent=11 // pred_region
          _
        $region28: #{tpu_custom_call.1} parent=11 // pred_fallthru
          _
        // Predicated region
        $region29: #{tpu_custom_call.1} parent=11 // pred_check
          %p331 = pneg %p152
        $region30: #{tpu_custom_call.1} parent=11 // pred_check_branch
          %333 = sbr.rel (%p331) target = $region32
        $region31: #{tpu_custom_call.1} parent=11 // pred_region
          _
        $region32: #{tpu_custom_call.1} parent=11 // pred_fallthru
          _
        // Predicated region
        $region33: #{tpu_custom_call.1} parent=11 // pred_check
          %p334 = pneg %p173
        $region34: #{tpu_custom_call.1} parent=11 // pred_check_branch
          %336 = sbr.rel (%p334) target = $region36
        $region35: #{tpu_custom_call.1} parent=11 // pred_region
          _
        $region36: #{tpu_custom_call.1} parent=11 // pred_fallthru
          _
        // Predicated region
        $region37: #{tpu_custom_call.1} parent=11 // pred_check
          %p337 = pneg %p194
        $region38: #{tpu_custom_call.1} parent=11 // pred_check_branch
          %339 = sbr.rel (%p337) target = $region40
        $region39: #{tpu_custom_call.1} parent=11 // pred_region
          _
        $region40: #{tpu_custom_call.1} parent=11 // pred_fallthru
          _
        // Predicated region
        $region41: #{tpu_custom_call.1} parent=11 // pred_check
          %p340 = pneg %p215
        $region42: #{tpu_custom_call.1} parent=11 // pred_check_branch
          %342 = sbr.rel (%p340) target = $region44
        $region43: #{tpu_custom_call.1} parent=11 // pred_region
          _
        $region44: #{tpu_custom_call.1} parent=11 // pred_fallthru
          _
        // Predicated region
        $region45: #{tpu_custom_call.1} parent=11 // pred_check
          %p343 = pneg %p236
        $region46: #{tpu_custom_call.1} parent=11 // pred_check_branch
          %345 = sbr.rel (%p343) target = $region48
        $region47: #{tpu_custom_call.1} parent=11 // pred_region
          _
        $region48: #{tpu_custom_call.1} parent=11 // pred_fallthru
          _
        // Predicated region
        $region49: #{tpu_custom_call.1} parent=11 // pred_check
          %p346 = pneg %p257
        $region50: #{tpu_custom_call.1} parent=11 // pred_check_branch
          %348 = sbr.rel (%p346) target = $region52
        $region51: #{tpu_custom_call.1} parent=11 // pred_region
          _
        $region52: #{tpu_custom_call.1} parent=11 // pred_fallthru
          _
        // Predicated region
        $region53: #{tpu_custom_call.1} parent=11 // pred_check
          %p349 = pneg %p278
        $region54: #{tpu_custom_call.1} parent=11 // pred_check_branch
          %351 = sbr.rel (%p349) target = $region56
        $region55: #{tpu_custom_call.1} parent=11 // pred_region
          _
        $region56: #{tpu_custom_call.1} parent=11 // pred_fallthru
          _
      $region12: #{tpu_custom_call.1} parent=5 // pred_fallthru
        _
      %p352 = scmp.lt.s32.totalorder %s21, 2
      // Predicated region
      $region57: #{tpu_custom_call.1} parent=5 // pred_check
        %p353 = pneg %p352
      $region58: #{tpu_custom_call.1} parent=5 // pred_check_branch
        %355 = sbr.rel (%p353) target = $region60
      $region59: #{tpu_custom_call.1} parent=5 // pred_region
        // Predicated region
        $region61: #{tpu_custom_call.1} parent=59 // pred_check
          %p356 = pneg %p41
        $region62: #{tpu_custom_call.1} parent=59 // pred_check_branch
          %358 = sbr.rel (%p356) target = $region64
        $region63: #{tpu_custom_call.1} parent=59 // pred_region
          %p359 = scmp.lt.s32.totalorder %s21, 1
          %s360 = scalar_select %p359, %s21, 1
          %s361 = smul.addr %s360, 8
          %s362 = scalar_lea.vmem %s0, %s361
        $region64: #{tpu_custom_call.1} parent=59 // pred_fallthru
          _
      $region60: #{tpu_custom_call.1} parent=5 // pred_fallthru
        _
      %p363 = scmp.le.s32.totalorder 1, %s21
      %p364 = scmp.lt.s32.totalorder %s21, 3
      %p365 = pnand %p363, %p364
      %p366 = pneg %p365
      // Predicated region
      $region65: #{tpu_custom_call.1} parent=5 // pred_check
        _
      $region66: #{tpu_custom_call.1} parent=5 // pred_check_branch
        %368 = sbr.rel (%p365) target = $region68
      $region67: #{tpu_custom_call.1} parent=5 // pred_region
        %s369 = ssub.s32 %s21, 1
        %p370 = scmp.lt.s32.totalorder %s26, 1
        %s371 = scalar_select %p370, %s26, 1
        %s372 = smul.addr %s371, 8
        %s373 = scalar_lea.vmem %s0, %s372
        %p374 = pneg %p47
        %p375 = pneg %p44
        %p376 = pneg %p68
        %p377 = pneg %p65
        %p378 = pneg %p89
        %p379 = pneg %p86
        %p380 = pneg %p110
        %p381 = pneg %p107
        %p382 = pneg %p131
        %p383 = pneg %p128
        %p384 = pneg %p152
        %p385 = pneg %p149
        %p386 = pneg %p173
        %p387 = pneg %p170
        %p388 = pneg %p194
        %p389 = pneg %p191
        %p390 = pneg %p215
        %p391 = pneg %p212
        %p392 = pneg %p236
        %p393 = pneg %p233
        %p394 = pneg %p257
        %p395 = pneg %p254
        %p396 = pneg %p278
        %p397 = pneg %p275
        %p398 = pneg %p304
        %p399 = pneg %p301
        %s400 = sand.u32 %s291, 1
        %s401 = scalar_lea.sflag [#allocation4], %s400
        %s402 = sand.u32 %s291, 1
        %s403 = smul.addr %s402, 8
        %s404 = scalar_lea.vmem [#allocation3], %s403
        %p405 = scmp.lt.s32.totalorder %s26, 1
        %s406 = scalar_select %p405, %s26, 1
        %s407 = smul.addr %s406, 8
        %s408 = scalar_lea.vmem %s0, %s407
        %v409 = vld [vmem:[%s408] sm:$0xff]
        %v410 = vld [vmem:[%s1] sm:$0x1]
        %v411 = vld [vmem:[%s2] sm:$0x1]
        %vm412 = vcmask 261120
        %v413 = vsel %vm412, %v409, 0.0
        %414 = vadd.xlane.f32.xlu0 %v413
        %v415 = vpop.xlane.xlu0 %414
        %v416 = vrcp.pop 32.0
        %v417 = vmul.f32 32.0, %v416
        %v418 = vsub.f32 1.0, %v417
        %v419 = vmul.f32 %v416, %v418
        %v420 = vadd.f32 %v416, %v419
        %vm421 = vweird.f32 %v416
        %v422 = vsel %vm421, %v416, %v420
        %v423 = vmul.f32 %v415, %v422
        %v424 = vsub.f32 %v409, %v423
        %v425 = vmul.f32 %v424, %v424
        %v426 = vsel %vm412, %v425, 0.0
        %427 = vadd.xlane.f32.xlu0 %v426
        %v428 = vpop.xlane.xlu0 %427
        %v429 = vmul.f32 %v428, %v422
        %v430 = vadd.f32 %v429, 1e-05
        %v431 = vrsqrt.pop %v430
        %v432 = vmul.f32 %v431, %v430
        %v433 = vmul.f32 %v432, %v431
        %v434 = vmul.f32 0.5, %v433
        %v435 = vsub.f32 1.5, %v434
        %v436 = vmul.f32 %v431, %v435
        %vm437 = vweird.f32 %v430
        %vm438 = vweird.f32 %v431
        %vm439 = vmor %vm437, %vm438
        %v440 = vsel %vm439, %v431, %v436
        %v441 = vmul.f32 %v424, %v440
        %v443 = vperm.slane %v410, 0
        %v445 = vmul.f32 %v441, %v443
        %v447 = vperm.slane %v411, 0
        %v449 = vadd.f32 %v445, %v447
        %v450 = vld [vmem:[%s3] sm:$0xff]
        %v451 = vld [vmem:[%s3 + $0x8] sm:$0xff]
        %v452 = vld [vmem:[%s3 + $0x10] sm:$0xff]
        %v453 = vld [vmem:[%s3 + $0x18] sm:$0xff]
        %v455 = vsel %vm412, %v449, 0
        %457 = vmatpush.msra.mxu0 0.0
        %458 = vmatpush.msra.mxu0 0.0
        %459 = vmatpush.msra.mxu0 0.0
        %460 = vmatpush.msra.mxu0 0.0
        %461 = vmatpush.msra.mxu0 0.0
        %462 = vmatpush.msra.mxu0 0.0
        %463 = vmatpush.msra.mxu0 0.0
        %464 = vmatpush.msra.mxu0 0.0
        %465 = vmatpush.msra.mxu0 0.0
        %466 = vmatpush.msra.mxu0 0.0
        %467 = vmatpush.msra.mxu0 0.0
        %468 = vmatpush.msra.mxu0 0.0
        %469 = vmatpush.msra.mxu0 %v453
        %470 = vmatpush.msra.mxu0 %v452
        %471 = vmatpush.msra.mxu0 %v451
        %472 = vmatpush.msra.mxu0 %v450
        %473 = vmatmul.f32.gmra.mxu0 %v455
        %v474 = vpop.f32.mrf.mxu0
        %v475 = vadd.f32 0.0, %v474
        %476 = vdwg.mxu0
        %478 = vrot.lane.b32.xlu0 %v475, 120
        %v479 = vpop.permute.xlu0 %478
        %480 = vrot.lane.b32.xlu0 %v475, 112
        %v481 = vpop.permute.xlu0 %480
        %482 = vrot.lane.b32.xlu0 %v475, 104
        %v483 = vpop.permute.xlu0 %482
        %484 = vrot.lane.b32.xlu0 %v475, 96
        %v485 = vpop.permute.xlu0 %484
        %486 = vrot.lane.b32.xlu0 %v475, 88
        %v487 = vpop.permute.xlu0 %486
        %488 = vrot.lane.b32.xlu0 %v475, 80
        %v489 = vpop.permute.xlu0 %488
        %490 = vrot.lane.b32.xlu0 %v475, 72
        %v491 = vpop.permute.xlu0 %490
        %492 = vrot.lane.b32.xlu0 %v475, 64
        %v493 = vpop.permute.xlu0 %492
        %495 = vrot.lane.b32.xlu0 %v475, 56
        %v496 = vpop.permute.xlu0 %495
        %498 = vrot.lane.b32.xlu0 %v475, 48
        %v499 = vpop.permute.xlu0 %498
        %501 = vrot.lane.b32.xlu0 %v475, 40
        %v502 = vpop.permute.xlu0 %501
        %vm504 = vcmask 64512
        %v505 = vsel %vm504, %v475, 0
        %v507 = vsel %vm504, %v485, 0
        %509 = vmatpush.xpose.msra.mxu0 0.0
        %510 = vmatpush.xpose.msra.mxu0 0.0
        %511 = vmatpush.xpose.msra.mxu0 0.0
        %512 = vmatpush.xpose.msra.mxu0 0.0
        %513 = vmatpush.xpose.msra.mxu0 0.0
        %514 = vmatpush.xpose.msra.mxu0 0.0
        %515 = vmatpush.xpose.msra.mxu0 0.0
        %516 = vmatpush.xpose.msra.mxu0 0.0
        %517 = vmatpush.xpose.msra.mxu0 0.0
        %518 = vmatpush.xpose.msra.mxu0 0.0
        %519 = vmatpush.xpose.msra.mxu0 0.0
        %520 = vmatpush.xpose.msra.mxu0 0.0
        %521 = vmatpush.xpose.msra.mxu0 0.0
        %522 = vmatpush.xpose.msra.mxu0 0.0
        %523 = vmatpush.xpose.msra.mxu0 0.0
        %524 = vmatpush.xpose.msra.mxu0 %v507
        %525 = vmatmul.f32.gmra.mxu0 %v505
        %v526 = vpop.f32.mrf.mxu0
        %v527 = vadd.f32 0.0, %v526
        %528 = vdwg.mxu0
        %v529 = vsel %vm504, %v479, 0
        %v531 = vsel %vm504, %v487, 0
        %533 = vmatpush.xpose.msra.mxu0 0.0
        %534 = vmatpush.xpose.msra.mxu0 0.0
        %535 = vmatpush.xpose.msra.mxu0 0.0
        %536 = vmatpush.xpose.msra.mxu0 0.0
        %537 = vmatpush.xpose.msra.mxu0 0.0
        %538 = vmatpush.xpose.msra.mxu0 0.0
        %539 = vmatpush.xpose.msra.mxu0 0.0
        %540 = vmatpush.xpose.msra.mxu0 0.0
        %541 = vmatpush.xpose.msra.mxu0 0.0
        %542 = vmatpush.xpose.msra.mxu0 0.0
        %543 = vmatpush.xpose.msra.mxu0 0.0
        %544 = vmatpush.xpose.msra.mxu0 0.0
        %545 = vmatpush.xpose.msra.mxu0 0.0
        %546 = vmatpush.xpose.msra.mxu0 0.0
        %547 = vmatpush.xpose.msra.mxu0 0.0
        %548 = vmatpush.xpose.msra.mxu0 %v531
        %549 = vmatmul.f32.gmra.mxu0 %v529
        %v550 = vpop.f32.mrf.mxu0
        %v551 = vadd.f32 0.0, %v550
        %552 = vdwg.mxu0
        %v553 = vsel %vm504, %v481, 0
        %v555 = vsel %vm504, %v489, 0
        %557 = vmatpush.xpose.msra.mxu0 0.0
        %558 = vmatpush.xpose.msra.mxu0 0.0
        %559 = vmatpush.xpose.msra.mxu0 0.0
        %560 = vmatpush.xpose.msra.mxu0 0.0
        %561 = vmatpush.xpose.msra.mxu0 0.0
        %562 = vmatpush.xpose.msra.mxu0 0.0
        %563 = vmatpush.xpose.msra.mxu0 0.0
        %564 = vmatpush.xpose.msra.mxu0 0.0
        %565 = vmatpush.xpose.msra.mxu0 0.0
        %566 = vmatpush.xpose.msra.mxu0 0.0
        %567 = vmatpush.xpose.msra.mxu0 0.0
        %568 = vmatpush.xpose.msra.mxu0 0.0
        %569 = vmatpush.xpose.msra.mxu0 0.0
        %570 = vmatpush.xpose.msra.mxu0 0.0
        %571 = vmatpush.xpose.msra.mxu0 0.0
        %572 = vmatpush.xpose.msra.mxu0 %v555
        %573 = vmatmul.f32.gmra.mxu0 %v553
        %v574 = vpop.f32.mrf.mxu0
        %v575 = vadd.f32 0.0, %v574
        %576 = vdwg.mxu0
        %v577 = vsel %vm504, %v483, 0
        %v579 = vsel %vm504, %v491, 0
        %581 = vmatpush.xpose.msra.mxu0 0.0
        %582 = vmatpush.xpose.msra.mxu0 0.0
        %583 = vmatpush.xpose.msra.mxu0 0.0
        %584 = vmatpush.xpose.msra.mxu0 0.0
        %585 = vmatpush.xpose.msra.mxu0 0.0
        %586 = vmatpush.xpose.msra.mxu0 0.0
        %587 = vmatpush.xpose.msra.mxu0 0.0
        %588 = vmatpush.xpose.msra.mxu0 0.0
        %589 = vmatpush.xpose.msra.mxu0 0.0
        %590 = vmatpush.xpose.msra.mxu0 0.0
        %591 = vmatpush.xpose.msra.mxu0 0.0
        %592 = vmatpush.xpose.msra.mxu0 0.0
        %593 = vmatpush.xpose.msra.mxu0 0.0
        %594 = vmatpush.xpose.msra.mxu0 0.0
        %595 = vmatpush.xpose.msra.mxu0 0.0
        %596 = vmatpush.xpose.msra.mxu0 %v579
        %597 = vmatmul.f32.gmra.mxu0 %v577
        %v598 = vpop.f32.mrf.mxu0
        %v599 = vadd.f32 0.0, %v598
        %600 = vdwg.mxu0
        %v601 = vsel %vm504, %v527, -inf
        %602 = vmax.xlane.f32.xlu0 %v601
        %v603 = vpop.xlane.xlu0 %602
        %v604 = vsel %vm504, %v551, -inf
        %605 = vmax.xlane.f32.xlu0 %v604
        %v606 = vpop.xlane.xlu0 %605
        %v607 = vsel %vm504, %v575, -inf
        %608 = vmax.xlane.f32.xlu0 %v607
        %v609 = vpop.xlane.xlu0 %608
        %v610 = vsel %vm504, %v599, -inf
        %611 = vmax.xlane.f32.xlu0 %v610
        %v612 = vpop.xlane.xlu0 %611
        %v613 = vsub.f32 %v527, %v603
        %v614 = vsub.f32 %v551, %v606
        %v615 = vsub.f32 %v575, %v609
        %v616 = vsub.f32 %v599, %v612
        %v617 = vmul.f32 %v613, 1.442695
        %v618 = vpow.pop %v617
        %v619 = vmul.f32 %v614, 1.442695
        %v620 = vpow.pop %v619
        %v621 = vmul.f32 %v615, 1.442695
        %v622 = vpow.pop %v621
        %v623 = vmul.f32 %v616, 1.442695
        %v624 = vpow.pop %v623
        %v625 = vsel %vm504, %v618, 0.0
        %626 = vadd.xlane.f32.xlu0 %v625
        %v627 = vpop.xlane.xlu0 %626
        %v628 = vsel %vm504, %v620, 0.0
        %629 = vadd.xlane.f32.xlu0 %v628
        %v630 = vpop.xlane.xlu0 %629
        %v631 = vsel %vm504, %v622, 0.0
        %632 = vadd.xlane.f32.xlu0 %v631
        %v633 = vpop.xlane.xlu0 %632
        %v634 = vsel %vm504, %v624, 0.0
        %635 = vadd.xlane.f32.xlu0 %v634
        %v636 = vpop.xlane.xlu0 %635
        %v638 = vsel %vm504, %v618, 0
        %640 = vmatpush.msra.mxu0 0.0
        %641 = vmatpush.msra.mxu0 0.0
        %642 = vmatpush.msra.mxu0 0.0
        %643 = vmatpush.msra.mxu0 0.0
        %644 = vmatpush.msra.mxu0 0.0
        %645 = vmatpush.msra.mxu0 0.0
        %646 = vmatpush.msra.mxu0 0.0
        %647 = vmatpush.msra.mxu0 0.0
        %648 = vmatpush.msra.mxu0 0.0
        %649 = vmatpush.msra.mxu0 0.0
        %650 = vmatpush.msra.mxu0 0.0
        %651 = vmatpush.msra.mxu0 0.0
        %652 = vmatpush.msra.mxu0 0.0
        %653 = vmatpush.msra.mxu0 0.0
        %654 = vmatpush.msra.mxu0 0.0
        %655 = vmatpush.msra.mxu0 %v493
        %656 = vmatmul.f32.gmra.mxu0 %v638
        %v657 = vpop.f32.mrf.mxu0
        %v658 = vadd.f32 0.0, %v657
        %659 = vdwg.mxu0
        %v661 = vsel %vm504, %v620, 0
        %663 = vmatpush.msra.mxu0 0.0
        %664 = vmatpush.msra.mxu0 0.0
        %665 = vmatpush.msra.mxu0 0.0
        %666 = vmatpush.msra.mxu0 0.0
        %667 = vmatpush.msra.mxu0 0.0
        %668 = vmatpush.msra.mxu0 0.0
        %669 = vmatpush.msra.mxu0 0.0
        %670 = vmatpush.msra.mxu0 0.0
        %671 = vmatpush.msra.mxu0 0.0
        %672 = vmatpush.msra.mxu0 0.0
        %673 = vmatpush.msra.mxu0 0.0
        %674 = vmatpush.msra.mxu0 0.0
        %675 = vmatpush.msra.mxu0 0.0
        %676 = vmatpush.msra.mxu0 0.0
        %677 = vmatpush.msra.mxu0 0.0
        %678 = vmatpush.msra.mxu0 %v496
        %679 = vmatmul.f32.gmra.mxu0 %v661
        %v680 = vpop.f32.mrf.mxu0
        %v681 = vadd.f32 0.0, %v680
        %682 = vdwg.mxu0
        %v684 = vsel %vm504, %v622, 0
        %686 = vmatpush.msra.mxu0 0.0
        %687 = vmatpush.msra.mxu0 0.0
        %688 = vmatpush.msra.mxu0 0.0
        %689 = vmatpush.msra.mxu0 0.0
        %690 = vmatpush.msra.mxu0 0.0
        %691 = vmatpush.msra.mxu0 0.0
        %692 = vmatpush.msra.mxu0 0.0
        %693 = vmatpush.msra.mxu0 0.0
        %694 = vmatpush.msra.mxu0 0.0
        %695 = vmatpush.msra.mxu0 0.0
        %696 = vmatpush.msra.mxu0 0.0
        %697 = vmatpush.msra.mxu0 0.0
        %698 = vmatpush.msra.mxu0 0.0
        %699 = vmatpush.msra.mxu0 0.0
        %700 = vmatpush.msra.mxu0 0.0
        %701 = vmatpush.msra.mxu0 %v499
        %702 = vmatmul.f32.gmra.mxu0 %v684
        %v703 = vpop.f32.mrf.mxu0
        %v704 = vadd.f32 0.0, %v703
        %705 = vdwg.mxu0
        %v707 = vsel %vm504, %v624, 0
        %709 = vmatpush.msra.mxu0 0.0
        %710 = vmatpush.msra.mxu0 0.0
        %711 = vmatpush.msra.mxu0 0.0
        %712 = vmatpush.msra.mxu0 0.0
        %713 = vmatpush.msra.mxu0 0.0
        %714 = vmatpush.msra.mxu0 0.0
        %715 = vmatpush.msra.mxu0 0.0
        %716 = vmatpush.msra.mxu0 0.0
        %717 = vmatpush.msra.mxu0 0.0
        %718 = vmatpush.msra.mxu0 0.0
        %719 = vmatpush.msra.mxu0 0.0
        %720 = vmatpush.msra.mxu0 0.0
        %721 = vmatpush.msra.mxu0 0.0
        %722 = vmatpush.msra.mxu0 0.0
        %723 = vmatpush.msra.mxu0 0.0
        %724 = vmatpush.msra.mxu0 %v502
        %725 = vmatmul.f32.gmra.mxu0 %v707
        %v726 = vpop.f32.mrf.mxu0
        %v727 = vadd.f32 0.0, %v726
        %728 = vdwg.mxu0
        %v729 = vrcp.pop %v627
        %v730 = vmul.f32 %v627, %v729
        %v731 = vsub.f32 1.0, %v730
        %v732 = vmul.f32 %v729, %v731
        %v733 = vadd.f32 %v729, %v732
        %vm734 = vweird.f32 %v627
        %vm735 = vweird.f32 %v729
        %vm736 = vmor %vm734, %vm735
        %v737 = vsel %vm736, %v729, %v733
        %v738 = vand.u32 2147483647, %v627
        %vm739 = vcmp.eq.f32.partialorder %v738, 8.507059e+37
        %v740 = vand.u32 %v627, 2147483648
        %v741 = vor.u32 1.1754944e-38, %v740
        %v742 = vsel %vm739, %v741, %v737
        %v743 = vmul.f32 %v658, %v742
        %v744 = vrcp.pop %v630
        %v745 = vmul.f32 %v630, %v744
        %v746 = vsub.f32 1.0, %v745
        %v747 = vmul.f32 %v744, %v746
        %v748 = vadd.f32 %v744, %v747
        %vm749 = vweird.f32 %v630
        %vm750 = vweird.f32 %v744
        %vm751 = vmor %vm749, %vm750
        %v752 = vsel %vm751, %v744, %v748
        %v753 = vand.u32 2147483647, %v630
        %vm754 = vcmp.eq.f32.partialorder %v753, 8.507059e+37
        %v755 = vand.u32 %v630, 2147483648
        %v756 = vor.u32 1.1754944e-38, %v755
        %v757 = vsel %vm754, %v756, %v752
        %v758 = vmul.f32 %v681, %v757
        %v759 = vrcp.pop %v633
        %v760 = vmul.f32 %v633, %v759
        %v761 = vsub.f32 1.0, %v760
        %v762 = vmul.f32 %v759, %v761
        %v763 = vadd.f32 %v759, %v762
        %vm764 = vweird.f32 %v633
        %vm765 = vweird.f32 %v759
        %vm766 = vmor %vm764, %vm765
        %v767 = vsel %vm766, %v759, %v763
        %v768 = vand.u32 2147483647, %v633
        %vm769 = vcmp.eq.f32.partialorder %v768, 8.507059e+37
        %v770 = vand.u32 %v633, 2147483648
        %v771 = vor.u32 1.1754944e-38, %v770
        %v772 = vsel %vm769, %v771, %v767
        %v773 = vmul.f32 %v704, %v772
        %v774 = vrcp.pop %v636
        %v775 = vmul.f32 %v636, %v774
        %v776 = vsub.f32 1.0, %v775
        %v777 = vmul.f32 %v774, %v776
        %v778 = vadd.f32 %v774, %v777
        %vm779 = vweird.f32 %v636
        %vm780 = vweird.f32 %v774
        %vm781 = vmor %vm779, %vm780
        %v782 = vsel %vm781, %v774, %v778
        %v783 = vand.u32 2147483647, %v636
        %vm784 = vcmp.eq.f32.partialorder %v783, 8.507059e+37
        %v785 = vand.u32 %v636, 2147483648
        %v786 = vor.u32 1.1754944e-38, %v785
        %v787 = vsel %vm784, %v786, %v782
        %v788 = vmul.f32 %v727, %v787
        %789 = vst.msk [vmem:[#allocation2] sm:$0xff] %vm504, %v743
        %791 = vrot.lane.b32.xlu0 %v758, 8
        %v792 = vpop.permute.xlu0 %791
        %vm794 = vcmask 130112
        %795 = vst.msk [vmem:[#allocation2] sm:$0xff] %vm794, %v792
        %797 = vrot.lane.b32.xlu0 %v773, 16
        %v798 = vpop.permute.xlu0 %797
        %vm800 = vcmask 195712
        %801 = vst.msk [vmem:[#allocation2] sm:$0xff] %vm800, %v798
        %803 = vrot.lane.b32.xlu0 %v788, 24
        %v804 = vpop.permute.xlu0 %803
        %vm806 = vcmask 261312
        %807 = vst.msk [vmem:[#allocation2] sm:$0xff] %vm806, %v804
        %v808 = vld [vmem:[#allocation2] sm:$0xff]
        %v809 = vld [vmem:[%s4] sm:$0xff]
        %v810 = vld [vmem:[%s4 + $0x8] sm:$0xff]
        %v811 = vld [vmem:[%s4 + $0x10] sm:$0xff]
        %v812 = vld [vmem:[%s4 + $0x18] sm:$0xff]
        %v813 = vld [vmem:[%s5] sm:$0x1]
        %v815 = vperm.slane %v813, 0
        %v818 = vsel %vm412, %v808, 0
        %820 = vmatpush.msra.mxu0 0.0
        %821 = vmatpush.msra.mxu0 0.0
        %822 = vmatpush.msra.mxu0 0.0
        %823 = vmatpush.msra.mxu0 0.0
        %824 = vmatpush.msra.mxu0 0.0
        %825 = vmatpush.msra.mxu0 0.0
        %826 = vmatpush.msra.mxu0 0.0
        %827 = vmatpush.msra.mxu0 0.0
        %828 = vmatpush.msra.mxu0 0.0
        %829 = vmatpush.msra.mxu0 0.0
        %830 = vmatpush.msra.mxu0 0.0
        %831 = vmatpush.msra.mxu0 0.0
        %832 = vmatpush.msra.mxu0 %v812
        %833 = vmatpush.msra.mxu0 %v811
        %834 = vmatpush.msra.mxu0 %v810
        %835 = vmatpush.msra.mxu0 %v809
        %836 = vmatmul.f32.gmra.mxu0 %v818
        %v837 = vpop.f32.mrf.mxu0
        %v838 = vadd.f32 %v815, %v837
        %839 = vdwg.mxu0
        %v840 = vadd.f32 %v409, %v838
        %v841 = vld [vmem:[%s6] sm:$0x1]
        %v842 = vld [vmem:[%s7] sm:$0x1]
        %v843 = vsel %vm412, %v840, 0.0
        %844 = vadd.xlane.f32.xlu0 %v843
        %v845 = vpop.xlane.xlu0 %844
        %v846 = vmul.f32 %v845, %v422
        %v847 = vsub.f32 %v840, %v846
        %v848 = vmul.f32 %v847, %v847
        %v849 = vsel %vm412, %v848, 0.0
        %850 = vadd.xlane.f32.xlu0 %v849
        %v851 = vpop.xlane.xlu0 %850
        %v852 = vmul.f32 %v851, %v422
        %v853 = vadd.f32 %v852, 1e-05
        %v854 = vrsqrt.pop %v853
        %v855 = vmul.f32 %v854, %v853
        %v856 = vmul.f32 %v855, %v854
        %v857 = vmul.f32 0.5, %v856
        %v858 = vsub.f32 1.5, %v857
        %v859 = vmul.f32 %v854, %v858
        %vm860 = vweird.f32 %v853
        %vm861 = vweird.f32 %v854
        %vm862 = vmor %vm860, %vm861
        %v863 = vsel %vm862, %v854, %v859
        %v864 = vmul.f32 %v847, %v863
        %v866 = vperm.slane %v841, 0
        %v868 = vmul.f32 %v864, %v866
        %v870 = vperm.slane %v842, 0
        %v872 = vadd.f32 %v868, %v870
        %v873 = vld [vmem:[%s8] sm:$0xff]
        %v874 = vld [vmem:[%s8 + $0x8] sm:$0xff]
        %v875 = vld [vmem:[%s8 + $0x10] sm:$0xff]
        %v876 = vld [vmem:[%s8 + $0x18] sm:$0xff]
        %v877 = vld [vmem:[%s9] sm:$0x1]
        %v879 = vperm.slane %v877, 0
        %v882 = vsel %vm412, %v872, 0
        %884 = vmatpush.msra.mxu0 0.0
        %885 = vmatpush.msra.mxu0 0.0
        %886 = vmatpush.msra.mxu0 0.0
        %887 = vmatpush.msra.mxu0 0.0
        %888 = vmatpush.msra.mxu0 0.0
        %889 = vmatpush.msra.mxu0 0.0
        %890 = vmatpush.msra.mxu0 0.0
        %891 = vmatpush.msra.mxu0 0.0
        %892 = vmatpush.msra.mxu0 0.0
        %893 = vmatpush.msra.mxu0 0.0
        %894 = vmatpush.msra.mxu0 0.0
        %895 = vmatpush.msra.mxu0 0.0
        %896 = vmatpush.msra.mxu0 %v876
        %897 = vmatpush.msra.mxu0 %v875
        %898 = vmatpush.msra.mxu0 %v874
        %899 = vmatpush.msra.mxu0 %v873
        %900 = vmatmul.f32.gmra.mxu0 %v882
        %v901 = vpop.f32.mrf.mxu0
        %v902 = vadd.f32 %v879, %v901
        %903 = vdwg.mxu0
        %v904 = vmul.f32 %v902, 0.5
        %v905 = vmul.f32 %v902, 0.70710677
        %v906 = vmul.f32 %v905, %v905
        %v907 = vmin.f32 16.0, %v906
        %v908 = vmul.f32 %v907, 2.1237322e-06
        %v909 = vadd.f32 %v908, 0.00028619796
        %v910 = vmul.f32 %v907, %v909
        %v911 = vadd.f32 %v910, 0.0036580483
        %v912 = vmul.f32 %v907, %v911
        %v913 = vadd.f32 %v912, 0.05243302
        %v914 = vmul.f32 %v907, %v913
        %v915 = vadd.f32 %v914, 0.18741608
        %v916 = vmul.f32 %v907, %v915
        %v917 = vadd.f32 %v916, 1.1283791
        %v918 = vmul.f32 %v905, %v917
        %v919 = vmul.f32 %v907, 3.8918573e-05
        %v920 = vadd.f32 %v919, 0.001143296
        %v921 = vmul.f32 %v907, %v920
        %v922 = vadd.f32 %v921, 0.014752088
        %v923 = vmul.f32 %v907, %v922
        %v924 = vadd.f32 %v923, 0.112945676
        %v925 = vmul.f32 %v907, %v924
        %v926 = vadd.f32 %v925, 0.4994258
        %v927 = vmul.f32 %v907, %v926
        %v928 = vadd.f32 %v927, 1.0
        %v929 = vrcp.pop %v928
        %v930 = vmul.f32 %v928, %v929
        %v931 = vsub.f32 1.0, %v930
        %v932 = vmul.f32 %v929, %v931
        %v933 = vadd.f32 %v929, %v932
        %vm934 = vweird.f32 %v928
        %vm935 = vweird.f32 %v929
        %vm936 = vmor %vm934, %vm935
        %v937 = vsel %vm936, %v929, %v933
        %v938 = vand.u32 2147483647, %v928
        %vm939 = vcmp.eq.f32.partialorder %v938, 8.507059e+37
        %v940 = vand.u32 %v928, 2147483648
        %v941 = vor.u32 1.1754944e-38, %v940
        %v942 = vsel %vm939, %v941, %v937
        %v943 = vmul.f32 %v918, %v942
        %v944 = vmin.f32 %v943, 1.0
        %v945 = vmax.f32 %v944, -1.0
        %v946 = vadd.f32 %v945, 1.0
        %v947 = vmul.f32 %v904, %v946
        %v948 = vld [vmem:[%s10] sm:$0xff]
        %v949 = vld [vmem:[%s10 + $0x8] sm:$0xff]
        %v950 = vld [vmem:[%s10 + $0x10] sm:$0xff]
        %v951 = vld [vmem:[%s10 + $0x18] sm:$0xff]
        %v952 = vld [vmem:[%s10 + $0x20] sm:$0xff]
        %v953 = vld [vmem:[%s10 + $0x28] sm:$0xff]
        %v954 = vld [vmem:[%s10 + $0x30] sm:$0xff]
        %v955 = vld [vmem:[%s10 + $0x38] sm:$0xff]
        %v956 = vld [vmem:[%s10 + $0x40] sm:$0xff]
        %v957 = vld [vmem:[%s10 + $0x48] sm:$0xff]
        %v958 = vld [vmem:[%s10 + $0x50] sm:$0xff]
        %v959 = vld [vmem:[%s10 + $0x58] sm:$0xff]
        %v960 = vld [vmem:[%s10 + $0x60] sm:$0xff]
        %v961 = vld [vmem:[%s10 + $0x68] sm:$0xff]
        %v962 = vld [vmem:[%s10 + $0x70] sm:$0xff]
        %v963 = vld [vmem:[%s10 + $0x78] sm:$0xff]
        %v964 = vld [vmem:[%s11] sm:$0x1]
        %v966 = vperm.slane %v964, 0
        %968 = vmatpush.msra.mxu0 %v963
        %969 = vmatpush.msra.mxu0 %v962
        %970 = vmatpush.msra.mxu0 %v961
        %971 = vmatpush.msra.mxu0 %v960
        %972 = vmatpush.msra.mxu0 %v959
        %973 = vmatpush.msra.mxu0 %v958
        %974 = vmatpush.msra.mxu0 %v957
        %975 = vmatpush.msra.mxu0 %v956
        %976 = vmatpush.msra.mxu0 %v955
        %977 = vmatpush.msra.mxu0 %v954
        %978 = vmatpush.msra.mxu0 %v953
        %979 = vmatpush.msra.mxu0 %v952
        %980 = vmatpush.msra.mxu0 %v951
        %981 = vmatpush.msra.mxu0 %v950
        %982 = vmatpush.msra.mxu0 %v949
        %983 = vmatpush.msra.mxu0 %v948
        %984 = vmatmul.f32.gmra.mxu0 %v947
        %v985 = vpop.f32.mrf.mxu0
        %v986 = vadd.f32 %v966, %v985
        %987 = vdwg.mxu0
        %v988 = vadd.f32 %v840, %v986
        %989 = vst.msk [vmem:[%s404] sm:$0xff] %vm412, %v988
        %s990 = sand.u32 %s291, 1
        %s991 = scalar_lea.sflag [#allocation4], %s990
        %s992 = sand.u32 %s291, 1
        %s993 = smul.addr %s992, 8
        %s994 = scalar_lea.vmem [#allocation3], %s993
        // Predicated region
        $region69: #{tpu_custom_call.1} parent=67 // pred_check
          %p995 = pneg %p301
        $region70: #{tpu_custom_call.1} parent=67 // pred_check_branch
          %997 = sbr.rel (%p995) target = $region72
        $region71: #{tpu_custom_call.1} parent=67 // pred_region
          %999 = vsyncadd %s991, 0
          %s1000 = smul.addr %s26, 8
          %s1001 = scalar_lea.hbm %s12, %s1000
          %s1003 = sshll.u32 %s994, 4
          %s1004 = int_to_ptr.vmem [resolvable:$true] %s1003
          %s1005 = sshll.u32 %s1001, 4
          %s1006 = int_to_ptr.hbm [resolvable:$true] %s1005
          %1008 = dma.vmem_to_hbm [thread:$0]  %s1004, 128, %s1006, %s991
        $region72: #{tpu_custom_call.1} parent=67 // pred_fallthru
          _
      $region68: #{tpu_custom_call.1} parent=5 // pred_fallthru
        _
      %p1009 = scmp.le.s32.totalorder 2, %s21
      // Predicated region
      $region73: #{tpu_custom_call.1} parent=5 // pred_check
        %p1010 = pneg %p1009
      $region74: #{tpu_custom_call.1} parent=5 // pred_check_branch
        %1012 = sbr.rel (%p1010) target = $region76
      $region75: #{tpu_custom_call.1} parent=5 // pred_region
        %s1013 = ssub.s32 %s21, 2
        // Predicated region
        $region77: #{tpu_custom_call.1} parent=75 // pred_check
          %p1014 = pneg %p307
        $region78: #{tpu_custom_call.1} parent=75 // pred_check_branch
          %1016 = sbr.rel (%p1014) target = $region80
        $region79: #{tpu_custom_call.1} parent=75 // pred_region
          %s1017 = sand.u32 %s292, 1
          %s1018 = scalar_lea.sflag [#allocation4], %s1017
          %s1019 = sand.u32 %s292, 1
          %s1020 = smul.addr %s1019, 8
          %s1021 = scalar_lea.vmem [#allocation3], %s1020
          %1023 = dma.done %s1018, 128
        $region80: #{tpu_custom_call.1} parent=75 // pred_fallthru
          _
      $region76: #{tpu_custom_call.1} parent=5 // pred_fallthru
        _
    $region6: #{tpu_custom_call.1} parent=1 // loop_footer
      %s25 = sadd.s32 1, %s21
    $region7: #{tpu_custom_call.1} parent=1 // loop_footer_branch
      %20 = sbr.rel target = $region3
    $region8: #{tpu_custom_call.1} parent=1 // loop_exit
      _
    %1024 = vsyncpa [#allocation4], 1
    %s1025 = scalar_lea.sflag [#allocation4], 1
    %1026 = vsyncpa %s1025, 1

</llo_original>
